<compile_context>
chip_gen: v5e
topology: v5e:2x2
jax: 0.10.0
libtpu: 0.0.40
codegen_flags: <defaults>
</compile_context>

<pallas_src>
import jax
import jax.numpy as jnp
from jax.experimental import pallas as pl
from jax.experimental.pallas import tpu as pltpu


def _round_up(x, m):
    return ((x + m - 1) // m) * m


def _pool_classify_kernel(h_ref, m_ref, w_ref, b_ref, o_ref, acc_ref, den_ref):
    """One (batch tile, seq tile) grid step.

    h_ref:   [TB, TS, D]  hidden states (storage dtype, e.g. bf16)
    m_ref:   [TB, TS, 1]  attention mask (f32, 1.0 = keep, 0.0 = pad)
    w_ref:   [D, Lp]      classification head weight (f32, lane-padded)
    b_ref:   [1, Lp]      classification head bias   (f32, lane-padded)
    o_ref:   [TB, Lp]     output logits (resident across the seq axis)
    acc_ref: [TB, D]      f32 scratch: running masked sum
    den_ref: [TB, 1]      f32 scratch: running token count
    """
    si = pl.program_id(1)

    @pl.when(si == 0)
    def _():
        acc_ref[...] = jnp.zeros_like(acc_ref)
        den_ref[...] = jnp.zeros_like(den_ref)

    h = h_ref[...]                                   # (TB, TS, D) storage dtype
    m = m_ref[...]                                   # (TB, TS, 1) f32

    # Mask is 0/1 so the narrow-dtype multiply is exact; reduce in f32.
    masked = h * m.astype(h.dtype)                   # lane broadcast, no relayout
    acc_ref[...] += jnp.sum(masked.astype(jnp.float32), axis=1)   # (TB, D)
    den_ref[...] += jnp.sum(m, axis=1)                            # (TB, 1)

    @pl.when(si == pl.num_programs(1) - 1)
    def _():
        denom = jnp.maximum(den_ref[...], 1.0)       # guard fully-padded rows
        pooled = acc_ref[...] * pl.reciprocal(denom, approx=True)   # EUP slot
        logits = jnp.dot(pooled, w_ref[...],
                         preferred_element_type=jnp.float32)        # MXU, once
        o_ref[...] = (logits + b_ref[...]).astype(o_ref.dtype)


def teacher_classify(hidden_states, attention_mask, head_w, head_b,
                     *, tb=None, ts=None, out_dtype=jnp.float32):
    """hidden_states: [B, S, D] (any float dtype), attention_mask: [B, S],
    head_w: [D, L], head_b: [1, L] or [L]  ->  logits [B, L] f32."""
    B, S, D = hidden_states.shape
    L = head_w.shape[-1]

    # ---- tile selection ----------------------------------------------------
    TB = 8 if tb is None else max(8, _round_up(int(tb), 8))
    itemsize = jnp.dtype(hidden_states.dtype).itemsize
    if ts is None:
        # Keep one hidden tile <= ~2 MiB so (2 inputs x 2 pipeline buffers)
        # plus the resident head weights stay far below the 32 MiB scoped-VMEM
        # limit requested below (and below v7x's 64 MiB physical VMEM).
        budget = 2 * 1024 * 1024
        ts = max(8, budget // max(1, TB * D * itemsize))
    TS = max(8, (min(int(ts), _round_up(S, 8)) // 8) * 8)

    Bp = _round_up(B, TB)
    Sp = _round_up(S, TS)
    Lp = _round_up(L, 128)        # lane-dense output / full MXU column block

    # ---- pad inputs (padded rows/cols are masked out or sliced off) --------
    h = hidden_states
    if (Bp, Sp) != (B, S):
        h = jnp.pad(h, ((0, Bp - B), (0, Sp - S), (0, 0)))
    m = attention_mask.astype(jnp.float32).reshape(B, S, 1)
    if (Bp, Sp) != (B, S):
        m = jnp.pad(m, ((0, Bp - B), (0, Sp - S), (0, 0)))
    w = head_w.astype(jnp.float32)
    b = head_b.reshape(1, L).astype(jnp.float32)
    if Lp != L:
        w = jnp.pad(w, ((0, 0), (0, Lp - L)))
        b = jnp.pad(b, ((0, 0), (0, Lp - L)))

    grid = (Bp // TB, Sp // TS)   # (batch tiles, seq tiles); seq = reduction (last)

    out = pl.pallas_call(
        _pool_classify_kernel,
        out_shape=jax.ShapeDtypeStruct((Bp, Lp), out_dtype),
        grid_spec=pltpu.PrefetchScalarGridSpec(
            num_scalar_prefetch=0,
            grid=grid,
            in_specs=[
                pl.BlockSpec((TB, TS, D), lambda bi, si: (bi, si, 0)),
                pl.BlockSpec((TB, TS, 1), lambda bi, si: (bi, si, 0)),
                pl.BlockSpec((D, Lp), lambda bi, si: (0, 0)),     # DMA'd once
                pl.BlockSpec((1, Lp), lambda bi, si: (0, 0)),     # DMA'd once
            ],
            # Block index independent of `si` -> logits stay resident across seq.
            out_specs=pl.BlockSpec((TB, Lp), lambda bi, si: (bi, 0)),
            scratch_shapes=[
                pltpu.VMEM((TB, D), jnp.float32),   # masked-sum accumulator
                pltpu.VMEM((TB, 1), jnp.float32),   # token-count accumulator
            ],
        ),
        compiler_params=pltpu.CompilerParams(
            dimension_semantics=("parallel", "arbitrary"),
            vmem_limit_bytes=32 * 1024 * 1024,
        ),
    )(h, m, w, b)

    return out[:B, :L]


def _reference(hidden_states, attention_mask, head_w, head_b):
    h = hidden_states.astype(jnp.float32)
    m = attention_mask.astype(jnp.float32)[:, :, None]
    pooled = (h * m).sum(axis=1) / jnp.maximum(m.sum(axis=1), 1.0)
    return pooled @ head_w.astype(jnp.float32) + head_b.reshape(1, -1)


if __name__ == "__main__":
    # Small, deterministic synthetic shapes consistent with the module:
    #   batch=16, seq=256, teacher hidden=256, num_labels=8
    B, S, D, L = 16, 256, 256, 8

    key = jax.random.PRNGKey(0)
    k_h, k_w, k_b, k_m = jax.random.split(key, 4)

    # teacher activations stored in bf16 (halves HBM traffic of the kernel)
    hidden_states = jax.random.normal(k_h, (B, S, D),
                                      dtype=jnp.float32).astype(jnp.bfloat16)

    # attention mask: first token always valid, random padding after
    mask_rand = (jax.random.uniform(k_m, (B, S)) > 0.3).astype(jnp.float32)
    attention_mask = mask_rand.at[:, 0].set(1.0)

    # deterministic classification-head params (nn.Linear(teacher_hidden, num_labels))
    head_w = jax.random.normal(k_w, (D, L), dtype=jnp.float32) * 0.02
    head_b = jax.random.normal(k_b, (1, L), dtype=jnp.float32) * 0.01

    # tb=8, ts=64 -> grid (2, 4): exercises batch-parallel tiles and the
    # multi-step seq accumulation / init / finalize paths.
    logits = teacher_classify(hidden_states, attention_mask, head_w, head_b,
                              tb=8, ts=64)
    logits = jax.block_until_ready(logits)

    ref = _reference(hidden_states, attention_mask, head_w, head_b)
    assert logits.shape == (B, L)
    err = float(jnp.max(jnp.abs(logits - ref)))
    assert jnp.allclose(logits, ref, atol=1e-3, rtol=1e-3), f"max err {err}"

    print("KERNEL_OK")
</pallas_src>

<mosaic_0001>
module attributes {stable_mosaic.version = 11 : i64} {
  func.func @_pool_classify_kernel(%arg0: i32, %arg1: i32, %arg2: memref<8x64x256xbf16, #tpu.memory_space<vmem>>, %arg3: memref<8x64x1xf32, #tpu.memory_space<vmem>>, %arg4: memref<256x128xf32, #tpu.memory_space<vmem>>, %arg5: memref<1x128xf32, #tpu.memory_space<vmem>>, %arg6: memref<8x128xf32, #tpu.memory_space<vmem>>, %arg7: memref<8x256xf32, #tpu.memory_space<vmem>>, %arg8: memref<8x1xf32, #tpu.memory_space<vmem>>) attributes {dimension_semantics = [#tpu.dimension_semantics<parallel>, #tpu.dimension_semantics<arbitrary>], iteration_bounds = array<i64: 2, 4>, scalar_prefetch = 0 : i64, scratch_operands = 2 : i64, tpu.core_type = #tpu.core_type<tc>, window_params = [{transform_indices = @transform_0, window_bounds = array<i64: 8, 64, 256>}, {transform_indices = @transform_1, window_bounds = array<i64: 8, 64, 1>}, {pipeline_mode = #tpu.pipeline_mode<synchronous>, transform_indices = @transform_2, window_bounds = array<i64: 256, 128>}, {pipeline_mode = #tpu.pipeline_mode<synchronous>, transform_indices = @transform_3, window_bounds = array<i64: 1, 128>}, {transform_indices = @transform_4, window_bounds = array<i64: 8, 128>}]} {
    %c0_i32 = arith.constant 0 : i32
    %0 = arith.cmpi eq, %arg1, %c0_i32 : i32
    %1 = arith.extui %0 : i1 to i32
    %c0_i32_0 = arith.constant 0 : i32
    %2 = arith.cmpi ne, %1, %c0_i32_0 : i32
    scf.if %2 {
      %cst_16 = arith.constant 0.000000e+00 : f32
      %20 = vector.broadcast %cst_16 : f32 to vector<8x256xf32>
      %c0_17 = arith.constant 0 : index
      %c0_18 = arith.constant 0 : index
      %21 = vector.load %arg7[%c0_17, %c0_18] : memref<8x256xf32, #tpu.memory_space<vmem>>, vector<8x256xf32>
      tpu.vector_store %arg7[%c0_17, %c0_18], %20 {strides = array<i32>} : memref<8x256xf32, #tpu.memory_space<vmem>>, vector<8x256xf32>,
      %cst_19 = arith.constant 0.000000e+00 : f32
      %22 = vector.broadcast %cst_19 : f32 to vector<8x1xf32>
      %c0_20 = arith.constant 0 : index
      %c0_21 = arith.constant 0 : index
      %23 = vector.load %arg8[%c0_20, %c0_21] : memref<8x1xf32, #tpu.memory_space<vmem>>, vector<8x1xf32>
      tpu.vector_store %arg8[%c0_20, %c0_21], %22 {strides = array<i32>} : memref<8x1xf32, #tpu.memory_space<vmem>>, vector<8x1xf32>,
    } else {
    }
    %c0 = arith.constant 0 : index
    %c0_1 = arith.constant 0 : index
    %c0_2 = arith.constant 0 : index
    %3 = vector.load %arg2[%c0, %c0_1, %c0_2] : memref<8x64x256xbf16, #tpu.memory_space<vmem>>, vector<8x64x256xbf16>
    %c0_3 = arith.constant 0 : index
    %c0_4 = arith.constant 0 : index
    %c0_5 = arith.constant 0 : index
    %4 = vector.load %arg3[%c0_3, %c0_4, %c0_5] : memref<8x64x1xf32, #tpu.memory_space<vmem>>, vector<8x64x1xf32>
    %5 = arith.truncf %4 : vector<8x64x1xf32> to vector<8x64x1xbf16>
    %6 = vector.broadcast %5 : vector<8x64x1xbf16> to vector<8x64x256xbf16>
    %7 = arith.mulf %3, %6 : vector<8x64x256xbf16>
    %c0_6 = arith.constant 0 : index
    %c0_7 = arith.constant 0 : index
    %8 = vector.load %arg7[%c0_6, %c0_7] : memref<8x256xf32, #tpu.memory_space<vmem>>, vector<8x256xf32>
    %9 = arith.extf %7 : vector<8x64x256xbf16> to vector<8x64x256xf32>
    %cst = arith.constant dense<0.000000e+00> : vector<8x256xf32>
    %10 = vector.multi_reduction <add>, %9, %cst [1] : vector<8x64x256xf32> to vector<8x256xf32>
    %11 = arith.addf %8, %10 : vector<8x256xf32>
    %c0_8 = arith.constant 0 : index
    %c0_9 = arith.constant 0 : index
    %12 = vector.load %arg7[%c0_8, %c0_9] : memref<8x256xf32, #tpu.memory_space<vmem>>, vector<8x256xf32>
    tpu.vector_store %arg7[%c0_8, %c0_9], %11 {strides = array<i32>} : memref<8x256xf32, #tpu.memory_space<vmem>>, vector<8x256xf32>,
    %c0_10 = arith.constant 0 : index
    %c0_11 = arith.constant 0 : index
    %13 = vector.load %arg8[%c0_10, %c0_11] : memref<8x1xf32, #tpu.memory_space<vmem>>, vector<8x1xf32>
    %cst_12 = arith.constant dense<0.000000e+00> : vector<8x1xf32>
    %14 = vector.multi_reduction <add>, %4, %cst_12 [1] : vector<8x64x1xf32> to vector<8x1xf32>
    %15 = arith.addf %13, %14 : vector<8x1xf32>
    %c0_13 = arith.constant 0 : index
    %c0_14 = arith.constant 0 : index
    %16 = vector.load %arg8[%c0_13, %c0_14] : memref<8x1xf32, #tpu.memory_space<vmem>>, vector<8x1xf32>
    tpu.vector_store %arg8[%c0_13, %c0_14], %15 {strides = array<i32>} : memref<8x1xf32, #tpu.memory_space<vmem>>, vector<8x1xf32>,
    %c3_i32 = arith.constant 3 : i32
    %17 = arith.cmpi eq, %arg1, %c3_i32 : i32
    %18 = arith.extui %17 : i1 to i32
    %c0_i32_15 = arith.constant 0 : i32
    %19 = arith.cmpi ne, %18, %c0_i32_15 : i32
    scf.if %19 {
      %c0_16 = arith.constant 0 : index
      %c0_17 = arith.constant 0 : index
      %20 = vector.load %arg8[%c0_16, %c0_17] : memref<8x1xf32, #tpu.memory_space<vmem>>, vector<8x1xf32>
      %cst_18 = arith.constant 1.000000e+00 : f32
      %21 = vector.broadcast %cst_18 : f32 to vector<8x1xf32>
      %22 = arith.maximumf %20, %21 : vector<8x1xf32>
      %c0_19 = arith.constant 0 : index
      %c0_20 = arith.constant 0 : index
      %23 = vector.load %arg7[%c0_19, %c0_20] : memref<8x256xf32, #tpu.memory_space<vmem>>, vector<8x256xf32>
      %24 = tpu.reciprocal %22 {approx = true} : vector<8x1xf32> -> vector<8x1xf32>
      %25 = vector.broadcast %24 : vector<8x1xf32> to vector<8x256xf32>
      %26 = arith.mulf %23, %25 : vector<8x256xf32>
      %c0_21 = arith.constant 0 : index
      %c0_22 = arith.constant 0 : index
      %27 = vector.load %arg4[%c0_21, %c0_22] : memref<256x128xf32, #tpu.memory_space<vmem>>, vector<256x128xf32>
      %cst_23 = arith.constant dense<0.000000e+00> : vector<8x128xf32>
      %28 = tpu.matmul %26, %27, %cst_23 {dimension_numbers = #tpu.dot_dimension_numbers<[1], [0], [0], [1], [0, 0, 1, 1], [], []>} : vector<8x256xf32>, vector<256x128xf32>, vector<8x128xf32> -> vector<8x128xf32>
      %c0_24 = arith.constant 0 : index
      %c0_25 = arith.constant 0 : index
      %29 = vector.load %arg5[%c0_24, %c0_25] : memref<1x128xf32, #tpu.memory_space<vmem>>, vector<1x128xf32>
      %30 = vector.broadcast %29 : vector<1x128xf32> to vector<8x128xf32>
      %31 = arith.addf %28, %30 : vector<8x128xf32>
      %c0_26 = arith.constant 0 : index
      %c0_27 = arith.constant 0 : index
      %32 = vector.load %arg6[%c0_26, %c0_27] : memref<8x128xf32, #tpu.memory_space<vmem>>, vector<8x128xf32>
      tpu.vector_store %arg6[%c0_26, %c0_27], %31 {strides = array<i32>} : memref<8x128xf32, #tpu.memory_space<vmem>>, vector<8x128xf32>,
    } else {
    }
    return
  }
  func.func @transform_0(%arg0: i32, %arg1: i32) -> (i32, i32, i32) {
    %c0_i32 = arith.constant 0 : i32
    %c0_i32_0 = arith.constant 0 : i32
    return %arg0, %arg1, %c0_i32 : i32, i32, i32
  }
  func.func @transform_1(%arg0: i32, %arg1: i32) -> (i32, i32, i32) {
    %c0_i32 = arith.constant 0 : i32
    %c0_i32_0 = arith.constant 0 : i32
    return %arg0, %arg1, %c0_i32 : i32, i32, i32
  }
  func.func @transform_2(%arg0: i32, %arg1: i32) -> (i32, i32) {
    %c0_i32 = arith.constant 0 : i32
    %c0_i32_0 = arith.constant 0 : i32
    %c0_i32_1 = arith.constant 0 : i32
    return %c0_i32, %c0_i32_0 : i32, i32
  }
  func.func @transform_3(%arg0: i32, %arg1: i32) -> (i32, i32) {
    %c0_i32 = arith.constant 0 : i32
    %c0_i32_0 = arith.constant 0 : i32
    %c0_i32_1 = arith.constant 0 : i32
    return %c0_i32, %c0_i32_0 : i32, i32
  }
  func.func @transform_4(%arg0: i32, %arg1: i32) -> (i32, i32) {
    %c0_i32 = arith.constant 0 : i32
    %c0_i32_0 = arith.constant 0 : i32
    return %arg0, %c0_i32 : i32, i32
  }
}

</mosaic_0001>

<llo_original>
// kernel: tpu_custom_call.1
$region0: #{tpu_custom_call.1}
  #allocation0 [shape = 'u32[]', space=smem, size = 0x4, offset = 0x4, fixed_abs, tag = 'smem constant byte address 0x4 - core index']
  #allocation1 [shape = 'u32[72,128]{1,0:T(1,128)}', space=vmem, size = 0x9000, scoped, tag = 'internal scratch']
  #allocation2 [shape = 'f32[8,256]{1,0:T(8,128)}', space=vmem, size = 0x2000, scoped, tag = 'scratch operand']
  #allocation3 [shape = 'f32[8,1]{1,0:T(8,128)}', space=vmem, size = 0x1000, scoped, tag = 'scratch operand']
  %s0 = inlined_call_operand.vmem [shape: bf16[16,256,256], index: 0, kind: input, shape index: {}]
  %s1 = inlined_call_operand.vmem [shape: f32[16,256,1], index: 1, kind: input, shape index: {}]
  %s2 = inlined_call_operand.hbm [shape: f32[256,128], index: 2, kind: input, shape index: {}]
  %s3 = inlined_call_operand.vmem [shape: f32[1,128], index: 3, kind: input, shape index: {}]
  %s4 = inlined_call_operand.hbm [shape: f32[16,128], index: 4, kind: output, shape index: {}]
  %s5 = sld [smem:[#allocation0]]
  $region137: #{tpu_custom_call.1} parent=0
    _
  %s7 = ssub.s32 1, %s5
  %s8 = scalar_select 0, %s7, %s5
  $region1: #{tpu_custom_call.1} parent=0
    #allocation4 [shape = 'u8[524288]{0}', space=vmem, size = 0x80000, scoped, tag = 'input window, operand 0']
    #allocation5 [shape = 'u8[524288]{0}', space=vmem, size = 0x80000, scoped, tag = 'input window, operand 1']
    #allocation6 [shape = 'u8[131072]{0}', space=vmem, size = 0x20000, scoped, tag = 'input window, operand 2, single buffered']
    #allocation7 [shape = 's32[2]{0}', space=sflag, size = 0x8, scoped, tag = 'scoped memory for tpu_custom_call.1']
    #allocation8 [shape = 's32[2]{0}', space=sflag, size = 0x8, scoped, tag = 'scoped memory for tpu_custom_call.1']
    #allocation9 [shape = 'u8[8192]{0}', space=vmem, size = 0x2000, scoped, tag = 'output window, operand 0']
    %9 = vsyncpa [#allocation7], 0
    %10 = vsyncpa [#allocation8], 0
    %s11 = scalar_lea.sflag [#allocation8], 1
    %12 = vsyncpa %s11, 0
    loop: start=0, step=1, limit=10
    $region2: #{tpu_custom_call.1} parent=1 // loop_pre_header
      _
    $region3: #{tpu_custom_call.1} parent=1 // loop_header
      %s14 = sphi 0, %s18
      %p15 = scmp.ge.s32.totalorder %s14, 10
      %s21 = sphi 0, %s33
      %s22 = sphi 0, %s29
      %s23 = sphi 0, %s21
      %s24 = sphi 0, %s22
      %s25 = sphi 0, %s23
      %s26 = sphi 0, %s24
      %s38 = sphi 0, %s40
      %s41 = sphi 0, %s38
      %s42 = sphi 0, %s41
      %s58 = sphi 0, %s42
      %s66 = sphi 0, %s68
      %s69 = sphi 0, %s66
      %s70 = sphi 0, %s69
      %s86 = sphi 0, %s70
      %s90 = sphi 0, %s90
      %s92 = sphi 0, %s90
      %s93 = sphi 0, %s92
      %s107 = sphi 0, %s93
      %s111 = sphi 0, %s111
      %s113 = sphi 0, %s111
      %s114 = sphi 0, %s113
      %s128 = sphi 0, %s114
      %s134 = sphi 0, %s136
      %s137 = sphi 0, %s134
      %s138 = sphi 0, %s137
      %s154 = sphi 0, %s138
    $region4: #{tpu_custom_call.1} parent=1 // loop_header_branch
      %17 = sbr.rel (%p15) target = $region8
    $region5: #{tpu_custom_call.1} parent=1 // loop_body
      %s19 = ssub.s32 %s14, 1
      %s20 = ssub.s32 %s14, 2
      %s27 = sadd.s32 1, %s22
      %p28 = scmp.ge.s32.totalorder %s27, 4
      %s29 = scalar_select %p28, 0, %s27
      %s30 = sadd.s32 1, %s21
      %s31 = scalar_select %p28, %s30, %s21
      %p32 = scmp.ge.s32.totalorder %s31, 2
      %s33 = scalar_select %p32, 0, %s31
      %s34 = ssub.s32 %s21, %s33
      %s35 = ssub.s32 %s22, %s29
      %s36 = sor.u32 %s34, %s35
      %p37 = scmp.eq.s32.totalorder %s36, 0
      %s39 = sadd.s32 %s38, 1
      %s40 = scalar_select %p37, %s38, %s39
      %p43 = pneg %p37
      %p44 = scmp.eq.s32.totalorder %s14, 7
      %p45 = por %p43, %p44
      %p46 = scmp.ne.s32.totalorder %s38, %s41
      %p47 = scmp.eq.s32.totalorder %s14, 0
      %p48 = por %p46, %p47
      %p49 = scmp.ne.s32.totalorder %s38, %s41
      %p50 = scmp.eq.s32.totalorder %s19, 7
      %p51 = por %p49, %p50
      %p52 = scmp.ne.s32.totalorder %s41, %s42
      %p53 = scmp.eq.s32.totalorder %s19, 0
      %p54 = por %p52, %p53
      %p55 = scmp.ne.s32.totalorder %s41, %s42
      %p56 = scmp.eq.s32.totalorder %s20, 7
      %p57 = por %p55, %p56
      %p59 = scmp.ne.s32.totalorder %s42, %s58
      %p60 = scmp.eq.s32.totalorder %s20, 0
      %p61 = por %p59, %p60
      %s62 = ssub.s32 %s21, %s33
      %s63 = ssub.s32 %s22, %s29
      %s64 = sor.u32 %s62, %s63
      %p65 = scmp.eq.s32.totalorder %s64, 0
      %s67 = sadd.s32 %s66, 1
      %s68 = scalar_select %p65, %s66, %s67
      %p71 = pneg %p65
      %p72 = scmp.eq.s32.totalorder %s14, 7
      %p73 = por %p71, %p72
      %p74 = scmp.ne.s32.totalorder %s66, %s69
      %p75 = scmp.eq.s32.totalorder %s14, 0
      %p76 = por %p74, %p75
      %p77 = scmp.ne.s32.totalorder %s66, %s69
      %p78 = scmp.eq.s32.totalorder %s19, 7
      %p79 = por %p77, %p78
      %p80 = scmp.ne.s32.totalorder %s69, %s70
      %p81 = scmp.eq.s32.totalorder %s19, 0
      %p82 = por %p80, %p81
      %p83 = scmp.ne.s32.totalorder %s69, %s70
      %p84 = scmp.eq.s32.totalorder %s20, 7
      %p85 = por %p83, %p84
      %p87 = scmp.ne.s32.totalorder %s70, %s86
      %p88 = scmp.eq.s32.totalorder %s20, 0
      %p89 = por %p87, %p88
      %s91 = sadd.s32 %s90, 1
      %p94 = scmp.eq.s32.totalorder %s14, 7
      %p95 = scmp.ne.s32.totalorder %s90, %s92
      %p96 = scmp.eq.s32.totalorder %s14, 0
      %p97 = por %p95, %p96
      %p98 = scmp.ne.s32.totalorder %s90, %s92
      %p99 = scmp.eq.s32.totalorder %s19, 7
      %p100 = por %p98, %p99
      %p101 = scmp.ne.s32.totalorder %s92, %s93
      %p102 = scmp.eq.s32.totalorder %s19, 0
      %p103 = por %p101, %p102
      %p104 = scmp.ne.s32.totalorder %s92, %s93
      %p105 = scmp.eq.s32.totalorder %s20, 7
      %p106 = por %p104, %p105
      %p108 = scmp.ne.s32.totalorder %s93, %s107
      %p109 = scmp.eq.s32.totalorder %s20, 0
      %p110 = por %p108, %p109
      %s112 = sadd.s32 %s111, 1
      %p115 = scmp.eq.s32.totalorder %s14, 7
      %p116 = scmp.ne.s32.totalorder %s111, %s113
      %p117 = scmp.eq.s32.totalorder %s14, 0
      %p118 = por %p116, %p117
      %p119 = scmp.ne.s32.totalorder %s111, %s113
      %p120 = scmp.eq.s32.totalorder %s19, 7
      %p121 = por %p119, %p120
      %p122 = scmp.ne.s32.totalorder %s113, %s114
      %p123 = scmp.eq.s32.totalorder %s19, 0
      %p124 = por %p122, %p123
      %p125 = scmp.ne.s32.totalorder %s113, %s114
      %p126 = scmp.eq.s32.totalorder %s20, 7
      %p127 = por %p125, %p126
      %p129 = scmp.ne.s32.totalorder %s114, %s128
      %p130 = scmp.eq.s32.totalorder %s20, 0
      %p131 = por %p129, %p130
      %s132 = ssub.s32 %s21, %s33
      %p133 = scmp.eq.s32.totalorder %s132, 0
      %s135 = sadd.s32 %s134, 1
      %s136 = scalar_select %p133, %s134, %s135
      %p139 = pneg %p133
      %p140 = scmp.eq.s32.totalorder %s14, 7
      %p141 = por %p139, %p140
      %p142 = scmp.ne.s32.totalorder %s134, %s137
      %p143 = scmp.eq.s32.totalorder %s14, 0
      %p144 = por %p142, %p143
      %p145 = scmp.ne.s32.totalorder %s134, %s137
      %p146 = scmp.eq.s32.totalorder %s19, 7
      %p147 = por %p145, %p146
      %p148 = scmp.ne.s32.totalorder %s137, %s138
      %p149 = scmp.eq.s32.totalorder %s19, 0
      %p150 = por %p148, %p149
      %p151 = scmp.ne.s32.totalorder %s137, %s138
      %p152 = scmp.eq.s32.totalorder %s20, 7
      %p153 = por %p151, %p152
      %p155 = scmp.ne.s32.totalorder %s138, %s154
      %p156 = scmp.eq.s32.totalorder %s20, 0
      %p157 = por %p155, %p156
      %p158 = scmp.le.s32.totalorder 1, %s14
      %p159 = scmp.lt.s32.totalorder %s14, 9
      %p160 = pnand %p158, %p159
      %p161 = pneg %p160
      // Predicated region
      $region9: #{tpu_custom_call.1} parent=5 // pred_check
        _
      $region10: #{tpu_custom_call.1} parent=5 // pred_check_branch
        %163 = sbr.rel (%p160) target = $region12
      $region11: #{tpu_custom_call.1} parent=5 // pred_region
        %s164 = ssub.s32 %s14, 1
        // Predicated region
        $region13: #{tpu_custom_call.1} parent=11 // pred_check
          %p165 = pneg %p103
        $region14: #{tpu_custom_call.1} parent=11 // pred_check_branch
          %167 = sbr.rel (%p165) target = $region16
        $region15: #{tpu_custom_call.1} parent=11 // pred_region
          %169 = vsyncadd [#allocation7], 0
          %s170 = sshll.u32 %s2, 4
          %s171 = int_to_ptr.hbm [resolvable:$true] %s170
          %s172 = sshll.u32 [#allocation6], 4
          %s173 = int_to_ptr.vmem [resolvable:$true] %s172
          %178 = dma.hbm_to_vmem [thread:$0]  %s171, 4096, %s173, [#allocation7], 128, 128, 8
        $region16: #{tpu_custom_call.1} parent=11 // pred_fallthru
          _
        // Predicated region
        $region17: #{tpu_custom_call.1} parent=11 // pred_check
          %p179 = pneg %p124
        $region18: #{tpu_custom_call.1} parent=11 // pred_check_branch
          %181 = sbr.rel (%p179) target = $region20
        $region19: #{tpu_custom_call.1} parent=11 // pred_region
          _
        $region20: #{tpu_custom_call.1} parent=11 // pred_fallthru
          _
      $region12: #{tpu_custom_call.1} parent=5 // pred_fallthru
        _
      %p182 = scmp.lt.s32.totalorder %s14, 8
      // Predicated region
      $region21: #{tpu_custom_call.1} parent=5 // pred_check
        %p183 = pneg %p182
      $region22: #{tpu_custom_call.1} parent=5 // pred_check_branch
        %185 = sbr.rel (%p183) target = $region24
      $region23: #{tpu_custom_call.1} parent=5 // pred_region
        // Predicated region
        $region25: #{tpu_custom_call.1} parent=23 // pred_check
          %p186 = pneg %p48
        $region26: #{tpu_custom_call.1} parent=23 // pred_check_branch
          %188 = sbr.rel (%p186) target = $region28
        $region27: #{tpu_custom_call.1} parent=23 // pred_region
          %s189 = sand.u32 %s38, 1
          %s190 = sand.u32 %s38, 1
          %s191 = smul.addr %s190, 512
          %s192 = scalar_lea.vmem [#allocation4], %s191
          %s193 = smul.u32 8, %s21
          %s194 = smul.u32 8, %s22
          %s195 = smul.addr %s194, 2
          %s196 = smul.addr %s193, 64
          %s197 = sadd.s32 %s195, %s196
          %s198 = smul.addr %s197, 4
          %s199 = scalar_lea.vmem %s0, %s198
          // Predicated region
          $region29: #{tpu_custom_call.1} parent=27 // pred_check
            _
          $region30: #{tpu_custom_call.1} parent=27 // pred_check_branch
            %201 = sbr.rel (0) target = $region32
          $region31: #{tpu_custom_call.1} parent=27 // pred_region
            // Predicated region
            $region33: #{tpu_custom_call.1} parent=31 // pred_check
              _
            $region34: #{tpu_custom_call.1} parent=31 // pred_check_branch
              %203 = sbr.rel (0) target = $region36
            $region35: #{tpu_custom_call.1} parent=31 // pred_region
              // Predicated region
              $region48: #{tpu_custom_call.1} parent=35 // pred_check
                _
              $region49: #{tpu_custom_call.1} parent=35 // pred_check_branch
                %345 = sbr.rel (0) target = $region51
              $region50: #{tpu_custom_call.1} parent=35 // pred_region
                loop: start=0, step=1, limit=1
                $region52: #{tpu_custom_call.1} parent=50 // loop_pre_header
                  _
                $region53: #{tpu_custom_call.1} parent=50 // loop_header
                  %s347 = sphi 0, %s351
                  %p348 = scmp.ge.s32.totalorder %s347, 1
                  %s352 = sphi %s199, %s199
                  %s353 = sphi %s192, %s192
                $region54: #{tpu_custom_call.1} parent=50 // loop_header_branch
                  %350 = sbr.rel (%p348) target = $region58
                $region55: #{tpu_custom_call.1} parent=50 // loop_body
                  %v354 = vld [vmem:[%s352] sm:$0xff]
                  %355 = vst [vmem:[%s353] sm:$0xff] %v354
                  %v356 = vld [vmem:[%s352 + $0x8] sm:$0xff]
                  %357 = vst [vmem:[%s353 + $0x8] sm:$0xff] %v356
                  %v358 = vld [vmem:[%s352 + $0x10] sm:$0xff]
                  %359 = vst [vmem:[%s353 + $0x10] sm:$0xff] %v358
                  %v360 = vld [vmem:[%s352 + $0x18] sm:$0xff]
                  %361 = vst [vmem:[%s353 + $0x18] sm:$0xff] %v360
                  %v362 = vld [vmem:[%s352 + $0x20] sm:$0xff]
                  %363 = vst [vmem:[%s353 + $0x20] sm:$0xff] %v362
                  %v364 = vld [vmem:[%s352 + $0x28] sm:$0xff]
                  %365 = vst [vmem:[%s353 + $0x28] sm:$0xff] %v364
                  %v366 = vld [vmem:[%s352 + $0x30] sm:$0xff]
                  %367 = vst [vmem:[%s353 + $0x30] sm:$0xff] %v366
                  %v368 = vld [vmem:[%s352 + $0x38] sm:$0xff]
                  %369 = vst [vmem:[%s353 + $0x38] sm:$0xff] %v368
                  %v370 = vld [vmem:[%s352 + $0x100] sm:$0xff]
                  %371 = vst [vmem:[%s353 + $0x40] sm:$0xff] %v370
                  %v372 = vld [vmem:[%s352 + $0x108] sm:$0xff]
                  %373 = vst [vmem:[%s353 + $0x48] sm:$0xff] %v372
                  %v374 = vld [vmem:[%s352 + $0x110] sm:$0xff]
                  %375 = vst [vmem:[%s353 + $0x50] sm:$0xff] %v374
                  %v376 = vld [vmem:[%s352 + $0x118] sm:$0xff]
                  %377 = vst [vmem:[%s353 + $0x58] sm:$0xff] %v376
                  %v378 = vld [vmem:[%s352 + $0x120] sm:$0xff]
                  %379 = vst [vmem:[%s353 + $0x60] sm:$0xff] %v378
                  %v380 = vld [vmem:[%s352 + $0x128] sm:$0xff]
                  %381 = vst [vmem:[%s353 + $0x68] sm:$0xff] %v380
                  %v382 = vld [vmem:[%s352 + $0x130] sm:$0xff]
                  %383 = vst [vmem:[%s353 + $0x70] sm:$0xff] %v382
                  %v384 = vld [vmem:[%s352 + $0x138] sm:$0xff]
                  %385 = vst [vmem:[%s353 + $0x78] sm:$0xff] %v384
                  %v386 = vld [vmem:[%s352 + $0x200] sm:$0xff]
                  %387 = vst [vmem:[%s353 + $0x80] sm:$0xff] %v386
                  %v388 = vld [vmem:[%s352 + $0x208] sm:$0xff]
                  %389 = vst [vmem:[%s353 + $0x88] sm:$0xff] %v388
                  %v390 = vld [vmem:[%s352 + $0x210] sm:$0xff]
                  %391 = vst [vmem:[%s353 + $0x90] sm:$0xff] %v390
                  %v392 = vld [vmem:[%s352 + $0x218] sm:$0xff]
                  %393 = vst [vmem:[%s353 + $0x98] sm:$0xff] %v392
                  %v394 = vld [vmem:[%s352 + $0x220] sm:$0xff]
                  %395 = vst [vmem:[%s353 + $0xa0] sm:$0xff] %v394
                  %v396 = vld [vmem:[%s352 + $0x228] sm:$0xff]
                  %397 = vst [vmem:[%s353 + $0xa8] sm:$0xff] %v396
                  %v398 = vld [vmem:[%s352 + $0x230] sm:$0xff]
                  %399 = vst [vmem:[%s353 + $0xb0] sm:$0xff] %v398
                  %v400 = vld [vmem:[%s352 + $0x238] sm:$0xff]
                  %401 = vst [vmem:[%s353 + $0xb8] sm:$0xff] %v400
                  %v402 = vld [vmem:[%s352 + $0x300] sm:$0xff]
                  %403 = vst [vmem:[%s353 + $0xc0] sm:$0xff] %v402
                  %v404 = vld [vmem:[%s352 + $0x308] sm:$0xff]
                  %405 = vst [vmem:[%s353 + $0xc8] sm:$0xff] %v404
                  %v406 = vld [vmem:[%s352 + $0x310] sm:$0xff]
                  %407 = vst [vmem:[%s353 + $0xd0] sm:$0xff] %v406
                  %v408 = vld [vmem:[%s352 + $0x318] sm:$0xff]
                  %409 = vst [vmem:[%s353 + $0xd8] sm:$0xff] %v408
                  %v410 = vld [vmem:[%s352 + $0x320] sm:$0xff]
                  %411 = vst [vmem:[%s353 + $0xe0] sm:$0xff] %v410
                  %v412 = vld [vmem:[%s352 + $0x328] sm:$0xff]
                  %413 = vst [vmem:[%s353 + $0xe8] sm:$0xff] %v412
                  %v414 = vld [vmem:[%s352 + $0x330] sm:$0xff]
                  %415 = vst [vmem:[%s353 + $0xf0] sm:$0xff] %v414
                  %v416 = vld [vmem:[%s352 + $0x338] sm:$0xff]
                  %417 = vst [vmem:[%s353 + $0xf8] sm:$0xff] %v416
                  %v418 = vld [vmem:[%s352 + $0x400] sm:$0xff]
                  %419 = vst [vmem:[%s353 + $0x100] sm:$0xff] %v418
                  %v420 = vld [vmem:[%s352 + $0x408] sm:$0xff]
                  %421 = vst [vmem:[%s353 + $0x108] sm:$0xff] %v420
                  %v422 = vld [vmem:[%s352 + $0x410] sm:$0xff]
                  %423 = vst [vmem:[%s353 + $0x110] sm:$0xff] %v422
                  %v424 = vld [vmem:[%s352 + $0x418] sm:$0xff]
                  %425 = vst [vmem:[%s353 + $0x118] sm:$0xff] %v424
                  %v426 = vld [vmem:[%s352 + $0x420] sm:$0xff]
                  %427 = vst [vmem:[%s353 + $0x120] sm:$0xff] %v426
                  %v428 = vld [vmem:[%s352 + $0x428] sm:$0xff]
                  %429 = vst [vmem:[%s353 + $0x128] sm:$0xff] %v428
                  %v430 = vld [vmem:[%s352 + $0x430] sm:$0xff]
                  %431 = vst [vmem:[%s353 + $0x130] sm:$0xff] %v430
                  %v432 = vld [vmem:[%s352 + $0x438] sm:$0xff]
                  %433 = vst [vmem:[%s353 + $0x138] sm:$0xff] %v432
                  %v434 = vld [vmem:[%s352 + $0x500] sm:$0xff]
                  %435 = vst [vmem:[%s353 + $0x140] sm:$0xff] %v434
                  %v436 = vld [vmem:[%s352 + $0x508] sm:$0xff]
                  %437 = vst [vmem:[%s353 + $0x148] sm:$0xff] %v436
                  %v438 = vld [vmem:[%s352 + $0x510] sm:$0xff]
                  %439 = vst [vmem:[%s353 + $0x150] sm:$0xff] %v438
                  %v440 = vld [vmem:[%s352 + $0x518] sm:$0xff]
                  %441 = vst [vmem:[%s353 + $0x158] sm:$0xff] %v440
                  %v442 = vld [vmem:[%s352 + $0x520] sm:$0xff]
                  %443 = vst [vmem:[%s353 + $0x160] sm:$0xff] %v442
                  %v444 = vld [vmem:[%s352 + $0x528] sm:$0xff]
                  %445 = vst [vmem:[%s353 + $0x168] sm:$0xff] %v444
                  %v446 = vld [vmem:[%s352 + $0x530] sm:$0xff]
                  %447 = vst [vmem:[%s353 + $0x170] sm:$0xff] %v446
                  %v448 = vld [vmem:[%s352 + $0x538] sm:$0xff]
                  %449 = vst [vmem:[%s353 + $0x178] sm:$0xff] %v448
                  %v450 = vld [vmem:[%s352 + $0x600] sm:$0xff]
                  %451 = vst [vmem:[%s353 + $0x180] sm:$0xff] %v450
                  %v452 = vld [vmem:[%s352 + $0x608] sm:$0xff]
                  %453 = vst [vmem:[%s353 + $0x188] sm:$0xff] %v452
                  %v454 = vld [vmem:[%s352 + $0x610] sm:$0xff]
                  %455 = vst [vmem:[%s353 + $0x190] sm:$0xff] %v454
                  %v456 = vld [vmem:[%s352 + $0x618] sm:$0xff]
                  %457 = vst [vmem:[%s353 + $0x198] sm:$0xff] %v456
                  %v458 = vld [vmem:[%s352 + $0x620] sm:$0xff]
                  %459 = vst [vmem:[%s353 + $0x1a0] sm:$0xff] %v458
                  %v460 = vld [vmem:[%s352 + $0x628] sm:$0xff]
                  %461 = vst [vmem:[%s353 + $0x1a8] sm:$0xff] %v460
                  %v462 = vld [vmem:[%s352 + $0x630] sm:$0xff]
                  %463 = vst [vmem:[%s353 + $0x1b0] sm:$0xff] %v462
                  %v464 = vld [vmem:[%s352 + $0x638] sm:$0xff]
                  %465 = vst [vmem:[%s353 + $0x1b8] sm:$0xff] %v464
                  %v466 = vld [vmem:[%s352 + $0x700] sm:$0xff]
                  %467 = vst [vmem:[%s353 + $0x1c0] sm:$0xff] %v466
                  %v468 = vld [vmem:[%s352 + $0x708] sm:$0xff]
                  %469 = vst [vmem:[%s353 + $0x1c8] sm:$0xff] %v468
                  %v470 = vld [vmem:[%s352 + $0x710] sm:$0xff]
                  %471 = vst [vmem:[%s353 + $0x1d0] sm:$0xff] %v470
                  %v472 = vld [vmem:[%s352 + $0x718] sm:$0xff]
                  %473 = vst [vmem:[%s353 + $0x1d8] sm:$0xff] %v472
                  %v474 = vld [vmem:[%s352 + $0x720] sm:$0xff]
                  %475 = vst [vmem:[%s353 + $0x1e0] sm:$0xff] %v474
                  %v476 = vld [vmem:[%s352 + $0x728] sm:$0xff]
                  %477 = vst [vmem:[%s353 + $0x1e8] sm:$0xff] %v476
                  %v478 = vld [vmem:[%s352 + $0x730] sm:$0xff]
                  %479 = vst [vmem:[%s353 + $0x1f0] sm:$0xff] %v478
                  %v480 = vld [vmem:[%s352 + $0x738] sm:$0xff]
                  %481 = vst [vmem:[%s353 + $0x1f8] sm:$0xff] %v480
                $region56: #{tpu_custom_call.1} parent=50 // loop_footer
                  %s351 = sadd.s32 1, %s347
                $region57: #{tpu_custom_call.1} parent=50 // loop_footer_branch
                  %346 = sbr.rel target = $region53
                $region58: #{tpu_custom_call.1} parent=50 // loop_exit
                  _
              $region51: #{tpu_custom_call.1} parent=35 // pred_fallthru
                _
              // Predicated region
              $region59: #{tpu_custom_call.1} parent=35 // pred_check
                _
              $region60: #{tpu_custom_call.1} parent=35 // pred_check_branch
                %483 = sbr.rel target = $region62
              $region61: #{tpu_custom_call.1} parent=35 // pred_region
                _
              $region62: #{tpu_custom_call.1} parent=35 // pred_fallthru
                _
            $region36: #{tpu_custom_call.1} parent=31 // pred_fallthru
              _
            // Predicated region
            $region37: #{tpu_custom_call.1} parent=31 // pred_check
              _
            $region38: #{tpu_custom_call.1} parent=31 // pred_check_branch
              %205 = sbr.rel target = $region40
            $region39: #{tpu_custom_call.1} parent=31 // pred_region
              %s207 = ssub.s32 256, 1
              loop: start=0, step=1, limit=1
              $region41: #{tpu_custom_call.1} parent=39 // loop_pre_header
                _
              $region42: #{tpu_custom_call.1} parent=39 // loop_header
                %s209 = sphi 0, %s213
                %p210 = scmp.ge.s32.totalorder %s209, 1
                %s214 = sphi %s199, %s199
                %s215 = sphi %s192, %s192
              $region43: #{tpu_custom_call.1} parent=39 // loop_header_branch
                %212 = sbr.rel (%p210) target = $region47
              $region44: #{tpu_custom_call.1} parent=39 // loop_body
                %v216 = vld [vmem:[%s214] sm:%s207]
                %217 = vst [vmem:[%s215] sm:%s207] %v216
                %v218 = vld [vmem:[%s214 + $0x8] sm:%s207]
                %219 = vst [vmem:[%s215 + $0x8] sm:%s207] %v218
                %v220 = vld [vmem:[%s214 + $0x10] sm:%s207]
                %221 = vst [vmem:[%s215 + $0x10] sm:%s207] %v220
                %v222 = vld [vmem:[%s214 + $0x18] sm:%s207]
                %223 = vst [vmem:[%s215 + $0x18] sm:%s207] %v222
                %v224 = vld [vmem:[%s214 + $0x20] sm:%s207]
                %225 = vst [vmem:[%s215 + $0x20] sm:%s207] %v224
                %v226 = vld [vmem:[%s214 + $0x28] sm:%s207]
                %227 = vst [vmem:[%s215 + $0x28] sm:%s207] %v226
                %v228 = vld [vmem:[%s214 + $0x30] sm:%s207]
                %229 = vst [vmem:[%s215 + $0x30] sm:%s207] %v228
                %v230 = vld [vmem:[%s214 + $0x38] sm:%s207]
                %231 = vst [vmem:[%s215 + $0x38] sm:%s207] %v230
                %v232 = vld [vmem:[%s214 + $0x100] sm:%s207]
                %233 = vst [vmem:[%s215 + $0x40] sm:%s207] %v232
                %v234 = vld [vmem:[%s214 + $0x108] sm:%s207]
                %235 = vst [vmem:[%s215 + $0x48] sm:%s207] %v234
                %v236 = vld [vmem:[%s214 + $0x110] sm:%s207]
                %237 = vst [vmem:[%s215 + $0x50] sm:%s207] %v236
                %v238 = vld [vmem:[%s214 + $0x118] sm:%s207]
                %239 = vst [vmem:[%s215 + $0x58] sm:%s207] %v238
                %v240 = vld [vmem:[%s214 + $0x120] sm:%s207]
                %241 = vst [vmem:[%s215 + $0x60] sm:%s207] %v240
                %v242 = vld [vmem:[%s214 + $0x128] sm:%s207]
                %243 = vst [vmem:[%s215 + $0x68] sm:%s207] %v242
                %v244 = vld [vmem:[%s214 + $0x130] sm:%s207]
                %245 = vst [vmem:[%s215 + $0x70] sm:%s207] %v244
                %v246 = vld [vmem:[%s214 + $0x138] sm:%s207]
                %247 = vst [vmem:[%s215 + $0x78] sm:%s207] %v246
                %v248 = vld [vmem:[%s214 + $0x200] sm:%s207]
                %249 = vst [vmem:[%s215 + $0x80] sm:%s207] %v248
                %v250 = vld [vmem:[%s214 + $0x208] sm:%s207]
                %251 = vst [vmem:[%s215 + $0x88] sm:%s207] %v250
                %v252 = vld [vmem:[%s214 + $0x210] sm:%s207]
                %253 = vst [vmem:[%s215 + $0x90] sm:%s207] %v252
                %v254 = vld [vmem:[%s214 + $0x218] sm:%s207]
                %255 = vst [vmem:[%s215 + $0x98] sm:%s207] %v254
                %v256 = vld [vmem:[%s214 + $0x220] sm:%s207]
                %257 = vst [vmem:[%s215 + $0xa0] sm:%s207] %v256
                %v258 = vld [vmem:[%s214 + $0x228] sm:%s207]
                %259 = vst [vmem:[%s215 + $0xa8] sm:%s207] %v258
                %v260 = vld [vmem:[%s214 + $0x230] sm:%s207]
                %261 = vst [vmem:[%s215 + $0xb0] sm:%s207] %v260
                %v262 = vld [vmem:[%s214 + $0x238] sm:%s207]
                %263 = vst [vmem:[%s215 + $0xb8] sm:%s207] %v262
                %v264 = vld [vmem:[%s214 + $0x300] sm:%s207]
                %265 = vst [vmem:[%s215 + $0xc0] sm:%s207] %v264
                %v266 = vld [vmem:[%s214 + $0x308] sm:%s207]
                %267 = vst [vmem:[%s215 + $0xc8] sm:%s207] %v266
                %v268 = vld [vmem:[%s214 + $0x310] sm:%s207]
                %269 = vst [vmem:[%s215 + $0xd0] sm:%s207] %v268
                %v270 = vld [vmem:[%s214 + $0x318] sm:%s207]
                %271 = vst [vmem:[%s215 + $0xd8] sm:%s207] %v270
                %v272 = vld [vmem:[%s214 + $0x320] sm:%s207]
                %273 = vst [vmem:[%s215 + $0xe0] sm:%s207] %v272
                %v274 = vld [vmem:[%s214 + $0x328] sm:%s207]
                %275 = vst [vmem:[%s215 + $0xe8] sm:%s207] %v274
                %v276 = vld [vmem:[%s214 + $0x330] sm:%s207]
                %277 = vst [vmem:[%s215 + $0xf0] sm:%s207] %v276
                %v278 = vld [vmem:[%s214 + $0x338] sm:%s207]
                %279 = vst [vmem:[%s215 + $0xf8] sm:%s207] %v278
                %v280 = vld [vmem:[%s214 + $0x400] sm:%s207]
                %281 = vst [vmem:[%s215 + $0x100] sm:%s207] %v280
                %v282 = vld [vmem:[%s214 + $0x408] sm:%s207]
                %283 = vst [vmem:[%s215 + $0x108] sm:%s207] %v282
                %v284 = vld [vmem:[%s214 + $0x410] sm:%s207]
                %285 = vst [vmem:[%s215 + $0x110] sm:%s207] %v284
                %v286 = vld [vmem:[%s214 + $0x418] sm:%s207]
                %287 = vst [vmem:[%s215 + $0x118] sm:%s207] %v286
                %v288 = vld [vmem:[%s214 + $0x420] sm:%s207]
                %289 = vst [vmem:[%s215 + $0x120] sm:%s207] %v288
                %v290 = vld [vmem:[%s214 + $0x428] sm:%s207]
                %291 = vst [vmem:[%s215 + $0x128] sm:%s207] %v290
                %v292 = vld [vmem:[%s214 + $0x430] sm:%s207]
                %293 = vst [vmem:[%s215 + $0x130] sm:%s207] %v292
                %v294 = vld [vmem:[%s214 + $0x438] sm:%s207]
                %295 = vst [vmem:[%s215 + $0x138] sm:%s207] %v294
                %v296 = vld [vmem:[%s214 + $0x500] sm:%s207]
                %297 = vst [vmem:[%s215 + $0x140] sm:%s207] %v296
                %v298 = vld [vmem:[%s214 + $0x508] sm:%s207]
                %299 = vst [vmem:[%s215 + $0x148] sm:%s207] %v298
                %v300 = vld [vmem:[%s214 + $0x510] sm:%s207]
                %301 = vst [vmem:[%s215 + $0x150] sm:%s207] %v300
                %v302 = vld [vmem:[%s214 + $0x518] sm:%s207]
                %303 = vst [vmem:[%s215 + $0x158] sm:%s207] %v302
                %v304 = vld [vmem:[%s214 + $0x520] sm:%s207]
                %305 = vst [vmem:[%s215 + $0x160] sm:%s207] %v304
                %v306 = vld [vmem:[%s214 + $0x528] sm:%s207]
                %307 = vst [vmem:[%s215 + $0x168] sm:%s207] %v306
                %v308 = vld [vmem:[%s214 + $0x530] sm:%s207]
                %309 = vst [vmem:[%s215 + $0x170] sm:%s207] %v308
                %v310 = vld [vmem:[%s214 + $0x538] sm:%s207]
                %311 = vst [vmem:[%s215 + $0x178] sm:%s207] %v310
                %v312 = vld [vmem:[%s214 + $0x600] sm:%s207]
                %313 = vst [vmem:[%s215 + $0x180] sm:%s207] %v312
                %v314 = vld [vmem:[%s214 + $0x608] sm:%s207]
                %315 = vst [vmem:[%s215 + $0x188] sm:%s207] %v314
                %v316 = vld [vmem:[%s214 + $0x610] sm:%s207]
                %317 = vst [vmem:[%s215 + $0x190] sm:%s207] %v316
                %v318 = vld [vmem:[%s214 + $0x618] sm:%s207]
                %319 = vst [vmem:[%s215 + $0x198] sm:%s207] %v318
                %v320 = vld [vmem:[%s214 + $0x620] sm:%s207]
                %321 = vst [vmem:[%s215 + $0x1a0] sm:%s207] %v320
                %v322 = vld [vmem:[%s214 + $0x628] sm:%s207]
                %323 = vst [vmem:[%s215 + $0x1a8] sm:%s207] %v322
                %v324 = vld [vmem:[%s214 + $0x630] sm:%s207]
                %325 = vst [vmem:[%s215 + $0x1b0] sm:%s207] %v324
                %v326 = vld [vmem:[%s214 + $0x638] sm:%s207]
                %327 = vst [vmem:[%s215 + $0x1b8] sm:%s207] %v326
                %v328 = vld [vmem:[%s214 + $0x700] sm:%s207]
                %329 = vst [vmem:[%s215 + $0x1c0] sm:%s207] %v328
                %v330 = vld [vmem:[%s214 + $0x708] sm:%s207]
                %331 = vst [vmem:[%s215 + $0x1c8] sm:%s207] %v330
                %v332 = vld [vmem:[%s214 + $0x710] sm:%s207]
                %333 = vst [vmem:[%s215 + $0x1d0] sm:%s207] %v332
                %v334 = vld [vmem:[%s214 + $0x718] sm:%s207]
                %335 = vst [vmem:[%s215 + $0x1d8] sm:%s207] %v334
                %v336 = vld [vmem:[%s214 + $0x720] sm:%s207]
                %337 = vst [vmem:[%s215 + $0x1e0] sm:%s207] %v336
                %v338 = vld [vmem:[%s214 + $0x728] sm:%s207]
                %339 = vst [vmem:[%s215 + $0x1e8] sm:%s207] %v338
                %v340 = vld [vmem:[%s214 + $0x730] sm:%s207]
                %341 = vst [vmem:[%s215 + $0x1f0] sm:%s207] %v340
                %v342 = vld [vmem:[%s214 + $0x738] sm:%s207]
                %343 = vst [vmem:[%s215 + $0x1f8] sm:%s207] %v342
              $region45: #{tpu_custom_call.1} parent=39 // loop_footer
                %s213 = sadd.s32 1, %s209
              $region46: #{tpu_custom_call.1} parent=39 // loop_footer_branch
                %208 = sbr.rel target = $region42
              $region47: #{tpu_custom_call.1} parent=39 // loop_exit
                _
            $region40: #{tpu_custom_call.1} parent=31 // pred_fallthru
              _
          $region32: #{tpu_custom_call.1} parent=27 // pred_fallthru
            _
          %484 = vnop
        $region28: #{tpu_custom_call.1} parent=23 // pred_fallthru
          _
        // Predicated region
        $region63: #{tpu_custom_call.1} parent=23 // pred_check
          %p485 = pneg %p76
        $region64: #{tpu_custom_call.1} parent=23 // pred_check_branch
          %487 = sbr.rel (%p485) target = $region66
        $region65: #{tpu_custom_call.1} parent=23 // pred_region
          %s488 = sand.u32 %s66, 1
          %s489 = sand.u32 %s66, 1
          %s490 = smul.addr %s489, 512
          %s491 = scalar_lea.vmem [#allocation5], %s490
          %s492 = smul.u32 8, %s21
          %s493 = smul.u32 8, %s22
          %s494 = smul.addr %s492, 32
          %s495 = sadd.s32 %s493, %s494
          %s496 = smul.addr %s495, 8
          %s497 = scalar_lea.vmem %s1, %s496
          // Predicated region
          $region67: #{tpu_custom_call.1} parent=65 // pred_check
            _
          $region68: #{tpu_custom_call.1} parent=65 // pred_check_branch
            %499 = sbr.rel (0) target = $region70
          $region69: #{tpu_custom_call.1} parent=65 // pred_region
            // Predicated region
            $region71: #{tpu_custom_call.1} parent=69 // pred_check
              _
            $region72: #{tpu_custom_call.1} parent=69 // pred_check_branch
              %501 = sbr.rel (0) target = $region74
            $region73: #{tpu_custom_call.1} parent=69 // pred_region
              // Predicated region
              $region86: #{tpu_custom_call.1} parent=73 // pred_check
                _
              $region87: #{tpu_custom_call.1} parent=73 // pred_check_branch
                %643 = sbr.rel (0) target = $region89
              $region88: #{tpu_custom_call.1} parent=73 // pred_region
                loop: start=0, step=1, limit=1
                $region90: #{tpu_custom_call.1} parent=88 // loop_pre_header
                  _
                $region91: #{tpu_custom_call.1} parent=88 // loop_header
                  %s645 = sphi 0, %s649
                  %p646 = scmp.ge.s32.totalorder %s645, 1
                  %s650 = sphi %s497, %s497
                  %s651 = sphi %s491, %s491
                $region92: #{tpu_custom_call.1} parent=88 // loop_header_branch
                  %648 = sbr.rel (%p646) target = $region96
                $region93: #{tpu_custom_call.1} parent=88 // loop_body
                  %v652 = vld [vmem:[%s650] sm:$0xff]
                  %653 = vst [vmem:[%s651] sm:$0xff] %v652
                  %v654 = vld [vmem:[%s650 + $0x8] sm:$0xff]
                  %655 = vst [vmem:[%s651 + $0x8] sm:$0xff] %v654
                  %v656 = vld [vmem:[%s650 + $0x10] sm:$0xff]
                  %657 = vst [vmem:[%s651 + $0x10] sm:$0xff] %v656
                  %v658 = vld [vmem:[%s650 + $0x18] sm:$0xff]
                  %659 = vst [vmem:[%s651 + $0x18] sm:$0xff] %v658
                  %v660 = vld [vmem:[%s650 + $0x20] sm:$0xff]
                  %661 = vst [vmem:[%s651 + $0x20] sm:$0xff] %v660
                  %v662 = vld [vmem:[%s650 + $0x28] sm:$0xff]
                  %663 = vst [vmem:[%s651 + $0x28] sm:$0xff] %v662
                  %v664 = vld [vmem:[%s650 + $0x30] sm:$0xff]
                  %665 = vst [vmem:[%s651 + $0x30] sm:$0xff] %v664
                  %v666 = vld [vmem:[%s650 + $0x38] sm:$0xff]
                  %667 = vst [vmem:[%s651 + $0x38] sm:$0xff] %v666
                  %v668 = vld [vmem:[%s650 + $0x100] sm:$0xff]
                  %669 = vst [vmem:[%s651 + $0x40] sm:$0xff] %v668
                  %v670 = vld [vmem:[%s650 + $0x108] sm:$0xff]
                  %671 = vst [vmem:[%s651 + $0x48] sm:$0xff] %v670
                  %v672 = vld [vmem:[%s650 + $0x110] sm:$0xff]
                  %673 = vst [vmem:[%s651 + $0x50] sm:$0xff] %v672
                  %v674 = vld [vmem:[%s650 + $0x118] sm:$0xff]
                  %675 = vst [vmem:[%s651 + $0x58] sm:$0xff] %v674
                  %v676 = vld [vmem:[%s650 + $0x120] sm:$0xff]
                  %677 = vst [vmem:[%s651 + $0x60] sm:$0xff] %v676
                  %v678 = vld [vmem:[%s650 + $0x128] sm:$0xff]
                  %679 = vst [vmem:[%s651 + $0x68] sm:$0xff] %v678
                  %v680 = vld [vmem:[%s650 + $0x130] sm:$0xff]
                  %681 = vst [vmem:[%s651 + $0x70] sm:$0xff] %v680
                  %v682 = vld [vmem:[%s650 + $0x138] sm:$0xff]
                  %683 = vst [vmem:[%s651 + $0x78] sm:$0xff] %v682
                  %v684 = vld [vmem:[%s650 + $0x200] sm:$0xff]
                  %685 = vst [vmem:[%s651 + $0x80] sm:$0xff] %v684
                  %v686 = vld [vmem:[%s650 + $0x208] sm:$0xff]
                  %687 = vst [vmem:[%s651 + $0x88] sm:$0xff] %v686
                  %v688 = vld [vmem:[%s650 + $0x210] sm:$0xff]
                  %689 = vst [vmem:[%s651 + $0x90] sm:$0xff] %v688
                  %v690 = vld [vmem:[%s650 + $0x218] sm:$0xff]
                  %691 = vst [vmem:[%s651 + $0x98] sm:$0xff] %v690
                  %v692 = vld [vmem:[%s650 + $0x220] sm:$0xff]
                  %693 = vst [vmem:[%s651 + $0xa0] sm:$0xff] %v692
                  %v694 = vld [vmem:[%s650 + $0x228] sm:$0xff]
                  %695 = vst [vmem:[%s651 + $0xa8] sm:$0xff] %v694
                  %v696 = vld [vmem:[%s650 + $0x230] sm:$0xff]
                  %697 = vst [vmem:[%s651 + $0xb0] sm:$0xff] %v696
                  %v698 = vld [vmem:[%s650 + $0x238] sm:$0xff]
                  %699 = vst [vmem:[%s651 + $0xb8] sm:$0xff] %v698
                  %v700 = vld [vmem:[%s650 + $0x300] sm:$0xff]
                  %701 = vst [vmem:[%s651 + $0xc0] sm:$0xff] %v700
                  %v702 = vld [vmem:[%s650 + $0x308] sm:$0xff]
                  %703 = vst [vmem:[%s651 + $0xc8] sm:$0xff] %v702
                  %v704 = vld [vmem:[%s650 + $0x310] sm:$0xff]
                  %705 = vst [vmem:[%s651 + $0xd0] sm:$0xff] %v704
                  %v706 = vld [vmem:[%s650 + $0x318] sm:$0xff]
                  %707 = vst [vmem:[%s651 + $0xd8] sm:$0xff] %v706
                  %v708 = vld [vmem:[%s650 + $0x320] sm:$0xff]
                  %709 = vst [vmem:[%s651 + $0xe0] sm:$0xff] %v708
                  %v710 = vld [vmem:[%s650 + $0x328] sm:$0xff]
                  %711 = vst [vmem:[%s651 + $0xe8] sm:$0xff] %v710
                  %v712 = vld [vmem:[%s650 + $0x330] sm:$0xff]
                  %713 = vst [vmem:[%s651 + $0xf0] sm:$0xff] %v712
                  %v714 = vld [vmem:[%s650 + $0x338] sm:$0xff]
                  %715 = vst [vmem:[%s651 + $0xf8] sm:$0xff] %v714
                  %v716 = vld [vmem:[%s650 + $0x400] sm:$0xff]
                  %717 = vst [vmem:[%s651 + $0x100] sm:$0xff] %v716
                  %v718 = vld [vmem:[%s650 + $0x408] sm:$0xff]
                  %719 = vst [vmem:[%s651 + $0x108] sm:$0xff] %v718
                  %v720 = vld [vmem:[%s650 + $0x410] sm:$0xff]
                  %721 = vst [vmem:[%s651 + $0x110] sm:$0xff] %v720
                  %v722 = vld [vmem:[%s650 + $0x418] sm:$0xff]
                  %723 = vst [vmem:[%s651 + $0x118] sm:$0xff] %v722
                  %v724 = vld [vmem:[%s650 + $0x420] sm:$0xff]
                  %725 = vst [vmem:[%s651 + $0x120] sm:$0xff] %v724
                  %v726 = vld [vmem:[%s650 + $0x428] sm:$0xff]
                  %727 = vst [vmem:[%s651 + $0x128] sm:$0xff] %v726
                  %v728 = vld [vmem:[%s650 + $0x430] sm:$0xff]
                  %729 = vst [vmem:[%s651 + $0x130] sm:$0xff] %v728
                  %v730 = vld [vmem:[%s650 + $0x438] sm:$0xff]
                  %731 = vst [vmem:[%s651 + $0x138] sm:$0xff] %v730
                  %v732 = vld [vmem:[%s650 + $0x500] sm:$0xff]
                  %733 = vst [vmem:[%s651 + $0x140] sm:$0xff] %v732
                  %v734 = vld [vmem:[%s650 + $0x508] sm:$0xff]
                  %735 = vst [vmem:[%s651 + $0x148] sm:$0xff] %v734
                  %v736 = vld [vmem:[%s650 + $0x510] sm:$0xff]
                  %737 = vst [vmem:[%s651 + $0x150] sm:$0xff] %v736
                  %v738 = vld [vmem:[%s650 + $0x518] sm:$0xff]
                  %739 = vst [vmem:[%s651 + $0x158] sm:$0xff] %v738
                  %v740 = vld [vmem:[%s650 + $0x520] sm:$0xff]
                  %741 = vst [vmem:[%s651 + $0x160] sm:$0xff] %v740
                  %v742 = vld [vmem:[%s650 + $0x528] sm:$0xff]
                  %743 = vst [vmem:[%s651 + $0x168] sm:$0xff] %v742
                  %v744 = vld [vmem:[%s650 + $0x530] sm:$0xff]
                  %745 = vst [vmem:[%s651 + $0x170] sm:$0xff] %v744
                  %v746 = vld [vmem:[%s650 + $0x538] sm:$0xff]
                  %747 = vst [vmem:[%s651 + $0x178] sm:$0xff] %v746
                  %v748 = vld [vmem:[%s650 + $0x600] sm:$0xff]
                  %749 = vst [vmem:[%s651 + $0x180] sm:$0xff] %v748
                  %v750 = vld [vmem:[%s650 + $0x608] sm:$0xff]
                  %751 = vst [vmem:[%s651 + $0x188] sm:$0xff] %v750
                  %v752 = vld [vmem:[%s650 + $0x610] sm:$0xff]
                  %753 = vst [vmem:[%s651 + $0x190] sm:$0xff] %v752
                  %v754 = vld [vmem:[%s650 + $0x618] sm:$0xff]
                  %755 = vst [vmem:[%s651 + $0x198] sm:$0xff] %v754
                  %v756 = vld [vmem:[%s650 + $0x620] sm:$0xff]
                  %757 = vst [vmem:[%s651 + $0x1a0] sm:$0xff] %v756
                  %v758 = vld [vmem:[%s650 + $0x628] sm:$0xff]
                  %759 = vst [vmem:[%s651 + $0x1a8] sm:$0xff] %v758
                  %v760 = vld [vmem:[%s650 + $0x630] sm:$0xff]
                  %761 = vst [vmem:[%s651 + $0x1b0] sm:$0xff] %v760
                  %v762 = vld [vmem:[%s650 + $0x638] sm:$0xff]
                  %763 = vst [vmem:[%s651 + $0x1b8] sm:$0xff] %v762
                  %v764 = vld [vmem:[%s650 + $0x700] sm:$0xff]
                  %765 = vst [vmem:[%s651 + $0x1c0] sm:$0xff] %v764
                  %v766 = vld [vmem:[%s650 + $0x708] sm:$0xff]
                  %767 = vst [vmem:[%s651 + $0x1c8] sm:$0xff] %v766
                  %v768 = vld [vmem:[%s650 + $0x710] sm:$0xff]
                  %769 = vst [vmem:[%s651 + $0x1d0] sm:$0xff] %v768
                  %v770 = vld [vmem:[%s650 + $0x718] sm:$0xff]
                  %771 = vst [vmem:[%s651 + $0x1d8] sm:$0xff] %v770
                  %v772 = vld [vmem:[%s650 + $0x720] sm:$0xff]
                  %773 = vst [vmem:[%s651 + $0x1e0] sm:$0xff] %v772
                  %v774 = vld [vmem:[%s650 + $0x728] sm:$0xff]
                  %775 = vst [vmem:[%s651 + $0x1e8] sm:$0xff] %v774
                  %v776 = vld [vmem:[%s650 + $0x730] sm:$0xff]
                  %777 = vst [vmem:[%s651 + $0x1f0] sm:$0xff] %v776
                  %v778 = vld [vmem:[%s650 + $0x738] sm:$0xff]
                  %779 = vst [vmem:[%s651 + $0x1f8] sm:$0xff] %v778
                $region94: #{tpu_custom_call.1} parent=88 // loop_footer
                  %s649 = sadd.s32 1, %s645
                $region95: #{tpu_custom_call.1} parent=88 // loop_footer_branch
                  %644 = sbr.rel target = $region91
                $region96: #{tpu_custom_call.1} parent=88 // loop_exit
                  _
              $region89: #{tpu_custom_call.1} parent=73 // pred_fallthru
                _
              // Predicated region
              $region97: #{tpu_custom_call.1} parent=73 // pred_check
                _
              $region98: #{tpu_custom_call.1} parent=73 // pred_check_branch
                %781 = sbr.rel target = $region100
              $region99: #{tpu_custom_call.1} parent=73 // pred_region
                _
              $region100: #{tpu_custom_call.1} parent=73 // pred_fallthru
                _
            $region74: #{tpu_custom_call.1} parent=69 // pred_fallthru
              _
            // Predicated region
            $region75: #{tpu_custom_call.1} parent=69 // pred_check
              _
            $region76: #{tpu_custom_call.1} parent=69 // pred_check_branch
              %503 = sbr.rel target = $region78
            $region77: #{tpu_custom_call.1} parent=69 // pred_region
              %s505 = ssub.s32 256, 1
              loop: start=0, step=1, limit=1
              $region79: #{tpu_custom_call.1} parent=77 // loop_pre_header
                _
              $region80: #{tpu_custom_call.1} parent=77 // loop_header
                %s507 = sphi 0, %s511
                %p508 = scmp.ge.s32.totalorder %s507, 1
                %s512 = sphi %s497, %s497
                %s513 = sphi %s491, %s491
              $region81: #{tpu_custom_call.1} parent=77 // loop_header_branch
                %510 = sbr.rel (%p508) target = $region85
              $region82: #{tpu_custom_call.1} parent=77 // loop_body
                %v514 = vld [vmem:[%s512] sm:%s505]
                %515 = vst [vmem:[%s513] sm:%s505] %v514
                %v516 = vld [vmem:[%s512 + $0x8] sm:%s505]
                %517 = vst [vmem:[%s513 + $0x8] sm:%s505] %v516
                %v518 = vld [vmem:[%s512 + $0x10] sm:%s505]
                %519 = vst [vmem:[%s513 + $0x10] sm:%s505] %v518
                %v520 = vld [vmem:[%s512 + $0x18] sm:%s505]
                %521 = vst [vmem:[%s513 + $0x18] sm:%s505] %v520
                %v522 = vld [vmem:[%s512 + $0x20] sm:%s505]
                %523 = vst [vmem:[%s513 + $0x20] sm:%s505] %v522
                %v524 = vld [vmem:[%s512 + $0x28] sm:%s505]
                %525 = vst [vmem:[%s513 + $0x28] sm:%s505] %v524
                %v526 = vld [vmem:[%s512 + $0x30] sm:%s505]
                %527 = vst [vmem:[%s513 + $0x30] sm:%s505] %v526
                %v528 = vld [vmem:[%s512 + $0x38] sm:%s505]
                %529 = vst [vmem:[%s513 + $0x38] sm:%s505] %v528
                %v530 = vld [vmem:[%s512 + $0x100] sm:%s505]
                %531 = vst [vmem:[%s513 + $0x40] sm:%s505] %v530
                %v532 = vld [vmem:[%s512 + $0x108] sm:%s505]
                %533 = vst [vmem:[%s513 + $0x48] sm:%s505] %v532
                %v534 = vld [vmem:[%s512 + $0x110] sm:%s505]
                %535 = vst [vmem:[%s513 + $0x50] sm:%s505] %v534
                %v536 = vld [vmem:[%s512 + $0x118] sm:%s505]
                %537 = vst [vmem:[%s513 + $0x58] sm:%s505] %v536
                %v538 = vld [vmem:[%s512 + $0x120] sm:%s505]
                %539 = vst [vmem:[%s513 + $0x60] sm:%s505] %v538
                %v540 = vld [vmem:[%s512 + $0x128] sm:%s505]
                %541 = vst [vmem:[%s513 + $0x68] sm:%s505] %v540
                %v542 = vld [vmem:[%s512 + $0x130] sm:%s505]
                %543 = vst [vmem:[%s513 + $0x70] sm:%s505] %v542
                %v544 = vld [vmem:[%s512 + $0x138] sm:%s505]
                %545 = vst [vmem:[%s513 + $0x78] sm:%s505] %v544
                %v546 = vld [vmem:[%s512 + $0x200] sm:%s505]
                %547 = vst [vmem:[%s513 + $0x80] sm:%s505] %v546
                %v548 = vld [vmem:[%s512 + $0x208] sm:%s505]
                %549 = vst [vmem:[%s513 + $0x88] sm:%s505] %v548
                %v550 = vld [vmem:[%s512 + $0x210] sm:%s505]
                %551 = vst [vmem:[%s513 + $0x90] sm:%s505] %v550
                %v552 = vld [vmem:[%s512 + $0x218] sm:%s505]
                %553 = vst [vmem:[%s513 + $0x98] sm:%s505] %v552
                %v554 = vld [vmem:[%s512 + $0x220] sm:%s505]
                %555 = vst [vmem:[%s513 + $0xa0] sm:%s505] %v554
                %v556 = vld [vmem:[%s512 + $0x228] sm:%s505]
                %557 = vst [vmem:[%s513 + $0xa8] sm:%s505] %v556
                %v558 = vld [vmem:[%s512 + $0x230] sm:%s505]
                %559 = vst [vmem:[%s513 + $0xb0] sm:%s505] %v558
                %v560 = vld [vmem:[%s512 + $0x238] sm:%s505]
                %561 = vst [vmem:[%s513 + $0xb8] sm:%s505] %v560
                %v562 = vld [vmem:[%s512 + $0x300] sm:%s505]
                %563 = vst [vmem:[%s513 + $0xc0] sm:%s505] %v562
                %v564 = vld [vmem:[%s512 + $0x308] sm:%s505]
                %565 = vst [vmem:[%s513 + $0xc8] sm:%s505] %v564
                %v566 = vld [vmem:[%s512 + $0x310] sm:%s505]
                %567 = vst [vmem:[%s513 + $0xd0] sm:%s505] %v566
                %v568 = vld [vmem:[%s512 + $0x318] sm:%s505]
                %569 = vst [vmem:[%s513 + $0xd8] sm:%s505] %v568
                %v570 = vld [vmem:[%s512 + $0x320] sm:%s505]
                %571 = vst [vmem:[%s513 + $0xe0] sm:%s505] %v570
                %v572 = vld [vmem:[%s512 + $0x328] sm:%s505]
                %573 = vst [vmem:[%s513 + $0xe8] sm:%s505] %v572
                %v574 = vld [vmem:[%s512 + $0x330] sm:%s505]
                %575 = vst [vmem:[%s513 + $0xf0] sm:%s505] %v574
                %v576 = vld [vmem:[%s512 + $0x338] sm:%s505]
                %577 = vst [vmem:[%s513 + $0xf8] sm:%s505] %v576
                %v578 = vld [vmem:[%s512 + $0x400] sm:%s505]
                %579 = vst [vmem:[%s513 + $0x100] sm:%s505] %v578
                %v580 = vld [vmem:[%s512 + $0x408] sm:%s505]
                %581 = vst [vmem:[%s513 + $0x108] sm:%s505] %v580
                %v582 = vld [vmem:[%s512 + $0x410] sm:%s505]
                %583 = vst [vmem:[%s513 + $0x110] sm:%s505] %v582
                %v584 = vld [vmem:[%s512 + $0x418] sm:%s505]
                %585 = vst [vmem:[%s513 + $0x118] sm:%s505] %v584
                %v586 = vld [vmem:[%s512 + $0x420] sm:%s505]
                %587 = vst [vmem:[%s513 + $0x120] sm:%s505] %v586
                %v588 = vld [vmem:[%s512 + $0x428] sm:%s505]
                %589 = vst [vmem:[%s513 + $0x128] sm:%s505] %v588
                %v590 = vld [vmem:[%s512 + $0x430] sm:%s505]
                %591 = vst [vmem:[%s513 + $0x130] sm:%s505] %v590
                %v592 = vld [vmem:[%s512 + $0x438] sm:%s505]
                %593 = vst [vmem:[%s513 + $0x138] sm:%s505] %v592
                %v594 = vld [vmem:[%s512 + $0x500] sm:%s505]
                %595 = vst [vmem:[%s513 + $0x140] sm:%s505] %v594
                %v596 = vld [vmem:[%s512 + $0x508] sm:%s505]
                %597 = vst [vmem:[%s513 + $0x148] sm:%s505] %v596
                %v598 = vld [vmem:[%s512 + $0x510] sm:%s505]
                %599 = vst [vmem:[%s513 + $0x150] sm:%s505] %v598
                %v600 = vld [vmem:[%s512 + $0x518] sm:%s505]
                %601 = vst [vmem:[%s513 + $0x158] sm:%s505] %v600
                %v602 = vld [vmem:[%s512 + $0x520] sm:%s505]
                %603 = vst [vmem:[%s513 + $0x160] sm:%s505] %v602
                %v604 = vld [vmem:[%s512 + $0x528] sm:%s505]
                %605 = vst [vmem:[%s513 + $0x168] sm:%s505] %v604
                %v606 = vld [vmem:[%s512 + $0x530] sm:%s505]
                %607 = vst [vmem:[%s513 + $0x170] sm:%s505] %v606
                %v608 = vld [vmem:[%s512 + $0x538] sm:%s505]
                %609 = vst [vmem:[%s513 + $0x178] sm:%s505] %v608
                %v610 = vld [vmem:[%s512 + $0x600] sm:%s505]
                %611 = vst [vmem:[%s513 + $0x180] sm:%s505] %v610
                %v612 = vld [vmem:[%s512 + $0x608] sm:%s505]
                %613 = vst [vmem:[%s513 + $0x188] sm:%s505] %v612
                %v614 = vld [vmem:[%s512 + $0x610] sm:%s505]
                %615 = vst [vmem:[%s513 + $0x190] sm:%s505] %v614
                %v616 = vld [vmem:[%s512 + $0x618] sm:%s505]
                %617 = vst [vmem:[%s513 + $0x198] sm:%s505] %v616
                %v618 = vld [vmem:[%s512 + $0x620] sm:%s505]
                %619 = vst [vmem:[%s513 + $0x1a0] sm:%s505] %v618
                %v620 = vld [vmem:[%s512 + $0x628] sm:%s505]
                %621 = vst [vmem:[%s513 + $0x1a8] sm:%s505] %v620
                %v622 = vld [vmem:[%s512 + $0x630] sm:%s505]
                %623 = vst [vmem:[%s513 + $0x1b0] sm:%s505] %v622
                %v624 = vld [vmem:[%s512 + $0x638] sm:%s505]
                %625 = vst [vmem:[%s513 + $0x1b8] sm:%s505] %v624
                %v626 = vld [vmem:[%s512 + $0x700] sm:%s505]
                %627 = vst [vmem:[%s513 + $0x1c0] sm:%s505] %v626
                %v628 = vld [vmem:[%s512 + $0x708] sm:%s505]
                %629 = vst [vmem:[%s513 + $0x1c8] sm:%s505] %v628
                %v630 = vld [vmem:[%s512 + $0x710] sm:%s505]
                %631 = vst [vmem:[%s513 + $0x1d0] sm:%s505] %v630
                %v632 = vld [vmem:[%s512 + $0x718] sm:%s505]
                %633 = vst [vmem:[%s513 + $0x1d8] sm:%s505] %v632
                %v634 = vld [vmem:[%s512 + $0x720] sm:%s505]
                %635 = vst [vmem:[%s513 + $0x1e0] sm:%s505] %v634
                %v636 = vld [vmem:[%s512 + $0x728] sm:%s505]
                %637 = vst [vmem:[%s513 + $0x1e8] sm:%s505] %v636
                %v638 = vld [vmem:[%s512 + $0x730] sm:%s505]
                %639 = vst [vmem:[%s513 + $0x1f0] sm:%s505] %v638
                %v640 = vld [vmem:[%s512 + $0x738] sm:%s505]
                %641 = vst [vmem:[%s513 + $0x1f8] sm:%s505] %v640
              $region83: #{tpu_custom_call.1} parent=77 // loop_footer
                %s511 = sadd.s32 1, %s507
              $region84: #{tpu_custom_call.1} parent=77 // loop_footer_branch
                %506 = sbr.rel target = $region80
              $region85: #{tpu_custom_call.1} parent=77 // loop_exit
                _
            $region78: #{tpu_custom_call.1} parent=69 // pred_fallthru
              _
          $region70: #{tpu_custom_call.1} parent=65 // pred_fallthru
            _
          %782 = vnop
        $region66: #{tpu_custom_call.1} parent=23 // pred_fallthru
          _
      $region24: #{tpu_custom_call.1} parent=5 // pred_fallthru
        _
      %p783 = scmp.le.s32.totalorder 1, %s14
      %p784 = scmp.lt.s32.totalorder %s14, 9
      %p785 = pnand %p783, %p784
      %p786 = pneg %p785
      // Predicated region
      $region101: #{tpu_custom_call.1} parent=5 // pred_check
        _
      $region102: #{tpu_custom_call.1} parent=5 // pred_check_branch
        %788 = sbr.rel (%p785) target = $region104
      $region103: #{tpu_custom_call.1} parent=5 // pred_region
        %s789 = ssub.s32 %s14, 1
        %s790 = sand.u32 %s41, 1
        %s791 = sand.u32 %s41, 1
        %s792 = smul.addr %s791, 512
        %s793 = scalar_lea.vmem [#allocation4], %s792
        // Predicated region
        $region105: #{tpu_custom_call.1} parent=103 // pred_check
          %p794 = pneg %p54
        $region106: #{tpu_custom_call.1} parent=103 // pred_check_branch
          %796 = sbr.rel (%p794) target = $region108
        $region107: #{tpu_custom_call.1} parent=103 // pred_region
          _
        $region108: #{tpu_custom_call.1} parent=103 // pred_fallthru
          _
        %s797 = sand.u32 %s69, 1
        %s798 = sand.u32 %s69, 1
        %s799 = smul.addr %s798, 512
        %s800 = scalar_lea.vmem [#allocation5], %s799
        // Predicated region
        $region109: #{tpu_custom_call.1} parent=103 // pred_check
          %p801 = pneg %p82
        $region110: #{tpu_custom_call.1} parent=103 // pred_check_branch
          %803 = sbr.rel (%p801) target = $region112
        $region111: #{tpu_custom_call.1} parent=103 // pred_region
          _
        $region112: #{tpu_custom_call.1} parent=103 // pred_fallthru
          _
        // Predicated region
        $region113: #{tpu_custom_call.1} parent=103 // pred_check
          %p804 = pneg %p103
        $region114: #{tpu_custom_call.1} parent=103 // pred_check_branch
          %806 = sbr.rel (%p804) target = $region116
        $region115: #{tpu_custom_call.1} parent=103 // pred_region
          %808 = dma.done [#allocation7], 4096
        $region116: #{tpu_custom_call.1} parent=103 // pred_fallthru
          _
        %s809 = sand.u32 %s41, 1
        %s810 = sand.u32 %s41, 1
        %s811 = smul.addr %s810, 512
        %s812 = scalar_lea.vmem [#allocation4], %s811
        %p813 = pneg %p54
        %p814 = pneg %p51
        %s815 = sand.u32 %s69, 1
        %s816 = sand.u32 %s69, 1
        %s817 = smul.addr %s816, 512
        %s818 = scalar_lea.vmem [#allocation5], %s817
        %p819 = pneg %p82
        %p820 = pneg %p79
        %p821 = pneg %p103
        %p822 = pneg %p100
        %p823 = pneg %p124
        %p824 = pneg %p121
        %p825 = pneg %p150
        %p826 = pneg %p147
        %s827 = sand.u32 %s137, 1
        %s828 = scalar_lea.sflag [#allocation8], %s827
        %s829 = sand.u32 %s137, 1
        %s830 = smul.addr %s829, 8
        %s831 = scalar_lea.vmem [#allocation9], %s830
        %s832 = smul.u32 8, %s23
        %s833 = smul.u32 8, %s24
        %s834 = smul.u32 8, %s23
        %s835 = smul.u32 8, %s24
        %p836 = scmp.eq.s32.totalorder %s24, 0
        // Predicated region
        $region117: #{tpu_custom_call.1} parent=103 // pred_check
          %p837 = pneg %p836
        $region118: #{tpu_custom_call.1} parent=103 // pred_check_branch
          %839 = sbr.rel (%p837) target = $region120
        $region119: #{tpu_custom_call.1} parent=103 // pred_region
          %840 = vst [vmem:[#allocation2] sm:$0xff] 0.0
          %841 = vst [vmem:[#allocation2 + $0x8] sm:$0xff] 0.0
          %vm842 = vcmask 7168
          %843 = vst.msk [vmem:[#allocation3] sm:$0xff] %vm842, 0.0
        $region120: #{tpu_custom_call.1} parent=103 // pred_fallthru
          _
        %v844 = vld [vmem:[%s793] sm:$0xff]
        %v845 = vld [vmem:[%s793 + $0x8] sm:$0xff]
        %v846 = vld [vmem:[%s793 + $0x10] sm:$0xff]
        %v847 = vld [vmem:[%s793 + $0x18] sm:$0xff]
        %v848 = vld [vmem:[%s793 + $0x20] sm:$0xff]
        %v849 = vld [vmem:[%s793 + $0x28] sm:$0xff]
        %v850 = vld [vmem:[%s793 + $0x30] sm:$0xff]
        %v851 = vld [vmem:[%s793 + $0x38] sm:$0xff]
        %v852 = vld [vmem:[%s793 + $0x40] sm:$0xff]
        %v853 = vld [vmem:[%s793 + $0x48] sm:$0xff]
        %v854 = vld [vmem:[%s793 + $0x50] sm:$0xff]
        %v855 = vld [vmem:[%s793 + $0x58] sm:$0xff]
        %v856 = vld [vmem:[%s793 + $0x60] sm:$0xff]
        %v857 = vld [vmem:[%s793 + $0x68] sm:$0xff]
        %v858 = vld [vmem:[%s793 + $0x70] sm:$0xff]
        %v859 = vld [vmem:[%s793 + $0x78] sm:$0xff]
        %v860 = vld [vmem:[%s793 + $0x80] sm:$0xff]
        %v861 = vld [vmem:[%s793 + $0x88] sm:$0xff]
        %v862 = vld [vmem:[%s793 + $0x90] sm:$0xff]
        %v863 = vld [vmem:[%s793 + $0x98] sm:$0xff]
        %v864 = vld [vmem:[%s793 + $0xa0] sm:$0xff]
        %v865 = vld [vmem:[%s793 + $0xa8] sm:$0xff]
        %v866 = vld [vmem:[%s793 + $0xb0] sm:$0xff]
        %v867 = vld [vmem:[%s793 + $0xb8] sm:$0xff]
        %v868 = vld [vmem:[%s793 + $0xc0] sm:$0xff]
        %v869 = vld [vmem:[%s793 + $0xc8] sm:$0xff]
        %v870 = vld [vmem:[%s793 + $0xd0] sm:$0xff]
        %v871 = vld [vmem:[%s793 + $0xd8] sm:$0xff]
        %v872 = vld [vmem:[%s793 + $0xe0] sm:$0xff]
        %v873 = vld [vmem:[%s793 + $0xe8] sm:$0xff]
        %v874 = vld [vmem:[%s793 + $0xf0] sm:$0xff]
        %v875 = vld [vmem:[%s793 + $0xf8] sm:$0xff]
        %v876 = vld [vmem:[%s793 + $0x100] sm:$0xff]
        %v877 = vld [vmem:[%s793 + $0x108] sm:$0xff]
        %v878 = vld [vmem:[%s793 + $0x110] sm:$0xff]
        %v879 = vld [vmem:[%s793 + $0x118] sm:$0xff]
        %v880 = vld [vmem:[%s793 + $0x120] sm:$0xff]
        %v881 = vld [vmem:[%s793 + $0x128] sm:$0xff]
        %v882 = vld [vmem:[%s793 + $0x130] sm:$0xff]
        %v883 = vld [vmem:[%s793 + $0x138] sm:$0xff]
        %v884 = vld [vmem:[%s793 + $0x140] sm:$0xff]
        %v885 = vld [vmem:[%s793 + $0x148] sm:$0xff]
        %v886 = vld [vmem:[%s793 + $0x150] sm:$0xff]
        %v887 = vld [vmem:[%s793 + $0x158] sm:$0xff]
        %v888 = vld [vmem:[%s793 + $0x160] sm:$0xff]
        %v889 = vld [vmem:[%s793 + $0x168] sm:$0xff]
        %v890 = vld [vmem:[%s793 + $0x170] sm:$0xff]
        %v891 = vld [vmem:[%s793 + $0x178] sm:$0xff]
        %v892 = vld [vmem:[%s793 + $0x180] sm:$0xff]
        %v893 = vld [vmem:[%s793 + $0x188] sm:$0xff]
        %v894 = vld [vmem:[%s793 + $0x190] sm:$0xff]
        %v895 = vld [vmem:[%s793 + $0x198] sm:$0xff]
        %v896 = vld [vmem:[%s793 + $0x1a0] sm:$0xff]
        %v897 = vld [vmem:[%s793 + $0x1a8] sm:$0xff]
        %v898 = vld [vmem:[%s793 + $0x1b0] sm:$0xff]
        %v899 = vld [vmem:[%s793 + $0x1b8] sm:$0xff]
        %v900 = vld [vmem:[%s793 + $0x1c0] sm:$0xff]
        %v901 = vld [vmem:[%s793 + $0x1c8] sm:$0xff]
        %v902 = vld [vmem:[%s793 + $0x1d0] sm:$0xff]
        %v903 = vld [vmem:[%s793 + $0x1d8] sm:$0xff]
        %v904 = vld [vmem:[%s793 + $0x1e0] sm:$0xff]
        %v905 = vld [vmem:[%s793 + $0x1e8] sm:$0xff]
        %v906 = vld [vmem:[%s793 + $0x1f0] sm:$0xff]
        %v907 = vld [vmem:[%s793 + $0x1f8] sm:$0xff]
        %v908 = vld [vmem:[%s800] sm:$0xff]
        %v909 = vld [vmem:[%s800 + $0x8] sm:$0xff]
        %v910 = vld [vmem:[%s800 + $0x10] sm:$0xff]
        %v911 = vld [vmem:[%s800 + $0x18] sm:$0xff]
        %v912 = vld [vmem:[%s800 + $0x20] sm:$0xff]
        %v913 = vld [vmem:[%s800 + $0x28] sm:$0xff]
        %v914 = vld [vmem:[%s800 + $0x30] sm:$0xff]
        %v915 = vld [vmem:[%s800 + $0x38] sm:$0xff]
        %v916 = vld [vmem:[%s800 + $0x40] sm:$0xff]
        %v917 = vld [vmem:[%s800 + $0x48] sm:$0xff]
        %v918 = vld [vmem:[%s800 + $0x50] sm:$0xff]
        %v919 = vld [vmem:[%s800 + $0x58] sm:$0xff]
        %v920 = vld [vmem:[%s800 + $0x60] sm:$0xff]
        %v921 = vld [vmem:[%s800 + $0x68] sm:$0xff]
        %v922 = vld [vmem:[%s800 + $0x70] sm:$0xff]
        %v923 = vld [vmem:[%s800 + $0x78] sm:$0xff]
        %v924 = vld [vmem:[%s800 + $0x80] sm:$0xff]
        %v925 = vld [vmem:[%s800 + $0x88] sm:$0xff]
        %v926 = vld [vmem:[%s800 + $0x90] sm:$0xff]
        %v927 = vld [vmem:[%s800 + $0x98] sm:$0xff]
        %v928 = vld [vmem:[%s800 + $0xa0] sm:$0xff]
        %v929 = vld [vmem:[%s800 + $0xa8] sm:$0xff]
        %v930 = vld [vmem:[%s800 + $0xb0] sm:$0xff]
        %v931 = vld [vmem:[%s800 + $0xb8] sm:$0xff]
        %v932 = vld [vmem:[%s800 + $0xc0] sm:$0xff]
        %v933 = vld [vmem:[%s800 + $0xc8] sm:$0xff]
        %v934 = vld [vmem:[%s800 + $0xd0] sm:$0xff]
        %v935 = vld [vmem:[%s800 + $0xd8] sm:$0xff]
        %v936 = vld [vmem:[%s800 + $0xe0] sm:$0xff]
        %v937 = vld [vmem:[%s800 + $0xe8] sm:$0xff]
        %v938 = vld [vmem:[%s800 + $0xf0] sm:$0xff]
        %v939 = vld [vmem:[%s800 + $0xf8] sm:$0xff]
        %v940 = vld [vmem:[%s800 + $0x100] sm:$0xff]
        %v941 = vld [vmem:[%s800 + $0x108] sm:$0xff]
        %v942 = vld [vmem:[%s800 + $0x110] sm:$0xff]
        %v943 = vld [vmem:[%s800 + $0x118] sm:$0xff]
        %v944 = vld [vmem:[%s800 + $0x120] sm:$0xff]
        %v945 = vld [vmem:[%s800 + $0x128] sm:$0xff]
        %v946 = vld [vmem:[%s800 + $0x130] sm:$0xff]
        %v947 = vld [vmem:[%s800 + $0x138] sm:$0xff]
        %v948 = vld [vmem:[%s800 + $0x140] sm:$0xff]
        %v949 = vld [vmem:[%s800 + $0x148] sm:$0xff]
        %v950 = vld [vmem:[%s800 + $0x150] sm:$0xff]
        %v951 = vld [vmem:[%s800 + $0x158] sm:$0xff]
        %v952 = vld [vmem:[%s800 + $0x160] sm:$0xff]
        %v953 = vld [vmem:[%s800 + $0x168] sm:$0xff]
        %v954 = vld [vmem:[%s800 + $0x170] sm:$0xff]
        %v955 = vld [vmem:[%s800 + $0x178] sm:$0xff]
        %v956 = vld [vmem:[%s800 + $0x180] sm:$0xff]
        %v957 = vld [vmem:[%s800 + $0x188] sm:$0xff]
        %v958 = vld [vmem:[%s800 + $0x190] sm:$0xff]
        %v959 = vld [vmem:[%s800 + $0x198] sm:$0xff]
        %v960 = vld [vmem:[%s800 + $0x1a0] sm:$0xff]
        %v961 = vld [vmem:[%s800 + $0x1a8] sm:$0xff]
        %v962 = vld [vmem:[%s800 + $0x1b0] sm:$0xff]
        %v963 = vld [vmem:[%s800 + $0x1b8] sm:$0xff]
        %v964 = vld [vmem:[%s800 + $0x1c0] sm:$0xff]
        %v965 = vld [vmem:[%s800 + $0x1c8] sm:$0xff]
        %v966 = vld [vmem:[%s800 + $0x1d0] sm:$0xff]
        %v967 = vld [vmem:[%s800 + $0x1d8] sm:$0xff]
        %v968 = vld [vmem:[%s800 + $0x1e0] sm:$0xff]
        %v969 = vld [vmem:[%s800 + $0x1e8] sm:$0xff]
        %v970 = vld [vmem:[%s800 + $0x1f0] sm:$0xff]
        %v971 = vld [vmem:[%s800 + $0x1f8] sm:$0xff]
        %v972 = vpack.c.bf16 %v908, %v908
        %v973 = vpack.c.bf16 %v909, %v909
        %v974 = vpack.c.bf16 %v910, %v910
        %v975 = vpack.c.bf16 %v911, %v911
        %v976 = vpack.c.bf16 %v912, %v912
        %v977 = vpack.c.bf16 %v913, %v913
        %v978 = vpack.c.bf16 %v914, %v914
        %v979 = vpack.c.bf16 %v915, %v915
        %v980 = vpack.c.bf16 %v916, %v916
        %v981 = vpack.c.bf16 %v917, %v917
        %v982 = vpack.c.bf16 %v918, %v918
        %v983 = vpack.c.bf16 %v919, %v919
        %v984 = vpack.c.bf16 %v920, %v920
        %v985 = vpack.c.bf16 %v921, %v921
        %v986 = vpack.c.bf16 %v922, %v922
        %v987 = vpack.c.bf16 %v923, %v923
        %v988 = vpack.c.bf16 %v924, %v924
        %v989 = vpack.c.bf16 %v925, %v925
        %v990 = vpack.c.bf16 %v926, %v926
        %v991 = vpack.c.bf16 %v927, %v927
        %v992 = vpack.c.bf16 %v928, %v928
        %v993 = vpack.c.bf16 %v929, %v929
        %v994 = vpack.c.bf16 %v930, %v930
        %v995 = vpack.c.bf16 %v931, %v931
        %v996 = vpack.c.bf16 %v932, %v932
        %v997 = vpack.c.bf16 %v933, %v933
        %v998 = vpack.c.bf16 %v934, %v934
        %v999 = vpack.c.bf16 %v935, %v935
        %v1000 = vpack.c.bf16 %v936, %v936
        %v1001 = vpack.c.bf16 %v937, %v937
        %v1002 = vpack.c.bf16 %v938, %v938
        %v1003 = vpack.c.bf16 %v939, %v939
        %v1004 = vpack.c.bf16 %v940, %v940
        %v1005 = vpack.c.bf16 %v941, %v941
        %v1006 = vpack.c.bf16 %v942, %v942
        %v1007 = vpack.c.bf16 %v943, %v943
        %v1008 = vpack.c.bf16 %v944, %v944
        %v1009 = vpack.c.bf16 %v945, %v945
        %v1010 = vpack.c.bf16 %v946, %v946
        %v1011 = vpack.c.bf16 %v947, %v947
        %v1012 = vpack.c.bf16 %v948, %v948
        %v1013 = vpack.c.bf16 %v949, %v949
        %v1014 = vpack.c.bf16 %v950, %v950
        %v1015 = vpack.c.bf16 %v951, %v951
        %v1016 = vpack.c.bf16 %v952, %v952
        %v1017 = vpack.c.bf16 %v953, %v953
        %v1018 = vpack.c.bf16 %v954, %v954
        %v1019 = vpack.c.bf16 %v955, %v955
        %v1020 = vpack.c.bf16 %v956, %v956
        %v1021 = vpack.c.bf16 %v957, %v957
        %v1022 = vpack.c.bf16 %v958, %v958
        %v1023 = vpack.c.bf16 %v959, %v959
        %v1024 = vpack.c.bf16 %v960, %v960
        %v1025 = vpack.c.bf16 %v961, %v961
        %v1026 = vpack.c.bf16 %v962, %v962
        %v1027 = vpack.c.bf16 %v963, %v963
        %v1028 = vpack.c.bf16 %v964, %v964
        %v1029 = vpack.c.bf16 %v965, %v965
        %v1030 = vpack.c.bf16 %v966, %v966
        %v1031 = vpack.c.bf16 %v967, %v967
        %v1032 = vpack.c.bf16 %v968, %v968
        %v1033 = vpack.c.bf16 %v969, %v969
        %v1034 = vpack.c.bf16 %v970, %v970
        %v1035 = vpack.c.bf16 %v971, %v971
        %1037 = vset.pattern.permute.xlu0 0
        %1038 = vperm.xlu0 %1037, %v972
        %v1039 = vpop.permute.xlu0 %1038
        %v1042 = vunpack.c.l.s4 839922192
        %v1043 = vunpack.c.0.s8 %v1042
        %v1044 = vperm.slane %v1039, %v1043
        %1046 = vset.pattern.permute.xlu0 0
        %1047 = vperm.xlu0 %1046, %v973
        %v1048 = vpop.permute.xlu0 %1047
        %v1051 = vunpack.c.l.s4 839922192
        %v1052 = vunpack.c.0.s8 %v1051
        %v1053 = vperm.slane %v1048, %v1052
        %1055 = vset.pattern.permute.xlu0 0
        %1056 = vperm.xlu0 %1055, %v974
        %v1057 = vpop.permute.xlu0 %1056
        %v1060 = vunpack.c.l.s4 839922192
        %v1061 = vunpack.c.0.s8 %v1060
        %v1062 = vperm.slane %v1057, %v1061
        %1064 = vset.pattern.permute.xlu0 0
        %1065 = vperm.xlu0 %1064, %v975
        %v1066 = vpop.permute.xlu0 %1065
        %v1069 = vunpack.c.l.s4 839922192
        %v1070 = vunpack.c.0.s8 %v1069
        %v1071 = vperm.slane %v1066, %v1070
        %1073 = vset.pattern.permute.xlu0 0
        %1074 = vperm.xlu0 %1073, %v976
        %v1075 = vpop.permute.xlu0 %1074
        %v1078 = vunpack.c.l.s4 839922192
        %v1079 = vunpack.c.0.s8 %v1078
        %v1080 = vperm.slane %v1075, %v1079
        %1082 = vset.pattern.permute.xlu0 0
        %1083 = vperm.xlu0 %1082, %v977
        %v1084 = vpop.permute.xlu0 %1083
        %v1087 = vunpack.c.l.s4 839922192
        %v1088 = vunpack.c.0.s8 %v1087
        %v1089 = vperm.slane %v1084, %v1088
        %1091 = vset.pattern.permute.xlu0 0
        %1092 = vperm.xlu0 %1091, %v978
        %v1093 = vpop.permute.xlu0 %1092
        %v1096 = vunpack.c.l.s4 839922192
        %v1097 = vunpack.c.0.s8 %v1096
        %v1098 = vperm.slane %v1093, %v1097
        %1100 = vset.pattern.permute.xlu0 0
        %1101 = vperm.xlu0 %1100, %v979
        %v1102 = vpop.permute.xlu0 %1101
        %v1105 = vunpack.c.l.s4 839922192
        %v1106 = vunpack.c.0.s8 %v1105
        %v1107 = vperm.slane %v1102, %v1106
        %1109 = vset.pattern.permute.xlu0 0
        %1110 = vperm.xlu0 %1109, %v980
        %v1111 = vpop.permute.xlu0 %1110
        %v1114 = vunpack.c.l.s4 839922192
        %v1115 = vunpack.c.0.s8 %v1114
        %v1116 = vperm.slane %v1111, %v1115
        %1118 = vset.pattern.permute.xlu0 0
        %1119 = vperm.xlu0 %1118, %v981
        %v1120 = vpop.permute.xlu0 %1119
        %v1123 = vunpack.c.l.s4 839922192
        %v1124 = vunpack.c.0.s8 %v1123
        %v1125 = vperm.slane %v1120, %v1124
        %1127 = vset.pattern.permute.xlu0 0
        %1128 = vperm.xlu0 %1127, %v982
        %v1129 = vpop.permute.xlu0 %1128
        %v1132 = vunpack.c.l.s4 839922192
        %v1133 = vunpack.c.0.s8 %v1132
        %v1134 = vperm.slane %v1129, %v1133
        %1136 = vset.pattern.permute.xlu0 0
        %1137 = vperm.xlu0 %1136, %v983
        %v1138 = vpop.permute.xlu0 %1137
        %v1141 = vunpack.c.l.s4 839922192
        %v1142 = vunpack.c.0.s8 %v1141
        %v1143 = vperm.slane %v1138, %v1142
        %1145 = vset.pattern.permute.xlu0 0
        %1146 = vperm.xlu0 %1145, %v984
        %v1147 = vpop.permute.xlu0 %1146
        %v1150 = vunpack.c.l.s4 839922192
        %v1151 = vunpack.c.0.s8 %v1150
        %v1152 = vperm.slane %v1147, %v1151
        %1154 = vset.pattern.permute.xlu0 0
        %1155 = vperm.xlu0 %1154, %v985
        %v1156 = vpop.permute.xlu0 %1155
        %v1159 = vunpack.c.l.s4 839922192
        %v1160 = vunpack.c.0.s8 %v1159
        %v1161 = vperm.slane %v1156, %v1160
        %1163 = vset.pattern.permute.xlu0 0
        %1164 = vperm.xlu0 %1163, %v986
        %v1165 = vpop.permute.xlu0 %1164
        %v1168 = vunpack.c.l.s4 839922192
        %v1169 = vunpack.c.0.s8 %v1168
        %v1170 = vperm.slane %v1165, %v1169
        %1172 = vset.pattern.permute.xlu0 0
        %1173 = vperm.xlu0 %1172, %v987
        %v1174 = vpop.permute.xlu0 %1173
        %v1177 = vunpack.c.l.s4 839922192
        %v1178 = vunpack.c.0.s8 %v1177
        %v1179 = vperm.slane %v1174, %v1178
        %1181 = vset.pattern.permute.xlu0 0
        %1182 = vperm.xlu0 %1181, %v988
        %v1183 = vpop.permute.xlu0 %1182
        %v1186 = vunpack.c.l.s4 839922192
        %v1187 = vunpack.c.0.s8 %v1186
        %v1188 = vperm.slane %v1183, %v1187
        %1190 = vset.pattern.permute.xlu0 0
        %1191 = vperm.xlu0 %1190, %v989
        %v1192 = vpop.permute.xlu0 %1191
        %v1195 = vunpack.c.l.s4 839922192
        %v1196 = vunpack.c.0.s8 %v1195
        %v1197 = vperm.slane %v1192, %v1196
        %1199 = vset.pattern.permute.xlu0 0
        %1200 = vperm.xlu0 %1199, %v990
        %v1201 = vpop.permute.xlu0 %1200
        %v1204 = vunpack.c.l.s4 839922192
        %v1205 = vunpack.c.0.s8 %v1204
        %v1206 = vperm.slane %v1201, %v1205
        %1208 = vset.pattern.permute.xlu0 0
        %1209 = vperm.xlu0 %1208, %v991
        %v1210 = vpop.permute.xlu0 %1209
        %v1213 = vunpack.c.l.s4 839922192
        %v1214 = vunpack.c.0.s8 %v1213
        %v1215 = vperm.slane %v1210, %v1214
        %1217 = vset.pattern.permute.xlu0 0
        %1218 = vperm.xlu0 %1217, %v992
        %v1219 = vpop.permute.xlu0 %1218
        %v1222 = vunpack.c.l.s4 839922192
        %v1223 = vunpack.c.0.s8 %v1222
        %v1224 = vperm.slane %v1219, %v1223
        %1226 = vset.pattern.permute.xlu0 0
        %1227 = vperm.xlu0 %1226, %v993
        %v1228 = vpop.permute.xlu0 %1227
        %v1231 = vunpack.c.l.s4 839922192
        %v1232 = vunpack.c.0.s8 %v1231
        %v1233 = vperm.slane %v1228, %v1232
        %1235 = vset.pattern.permute.xlu0 0
        %1236 = vperm.xlu0 %1235, %v994
        %v1237 = vpop.permute.xlu0 %1236
        %v1240 = vunpack.c.l.s4 839922192
        %v1241 = vunpack.c.0.s8 %v1240
        %v1242 = vperm.slane %v1237, %v1241
        %1244 = vset.pattern.permute.xlu0 0
        %1245 = vperm.xlu0 %1244, %v995
        %v1246 = vpop.permute.xlu0 %1245
        %v1249 = vunpack.c.l.s4 839922192
        %v1250 = vunpack.c.0.s8 %v1249
        %v1251 = vperm.slane %v1246, %v1250
        %1253 = vset.pattern.permute.xlu0 0
        %1254 = vperm.xlu0 %1253, %v996
        %v1255 = vpop.permute.xlu0 %1254
        %v1258 = vunpack.c.l.s4 839922192
        %v1259 = vunpack.c.0.s8 %v1258
        %v1260 = vperm.slane %v1255, %v1259
        %1262 = vset.pattern.permute.xlu0 0
        %1263 = vperm.xlu0 %1262, %v997
        %v1264 = vpop.permute.xlu0 %1263
        %v1267 = vunpack.c.l.s4 839922192
        %v1268 = vunpack.c.0.s8 %v1267
        %v1269 = vperm.slane %v1264, %v1268
        %1271 = vset.pattern.permute.xlu0 0
        %1272 = vperm.xlu0 %1271, %v998
        %v1273 = vpop.permute.xlu0 %1272
        %v1276 = vunpack.c.l.s4 839922192
        %v1277 = vunpack.c.0.s8 %v1276
        %v1278 = vperm.slane %v1273, %v1277
        %1280 = vset.pattern.permute.xlu0 0
        %1281 = vperm.xlu0 %1280, %v999
        %v1282 = vpop.permute.xlu0 %1281
        %v1285 = vunpack.c.l.s4 839922192
        %v1286 = vunpack.c.0.s8 %v1285
        %v1287 = vperm.slane %v1282, %v1286
        %1289 = vset.pattern.permute.xlu0 0
        %1290 = vperm.xlu0 %1289, %v1000
        %v1291 = vpop.permute.xlu0 %1290
        %v1294 = vunpack.c.l.s4 839922192
        %v1295 = vunpack.c.0.s8 %v1294
        %v1296 = vperm.slane %v1291, %v1295
        %1298 = vset.pattern.permute.xlu0 0
        %1299 = vperm.xlu0 %1298, %v1001
        %v1300 = vpop.permute.xlu0 %1299
        %v1303 = vunpack.c.l.s4 839922192
        %v1304 = vunpack.c.0.s8 %v1303
        %v1305 = vperm.slane %v1300, %v1304
        %1307 = vset.pattern.permute.xlu0 0
        %1308 = vperm.xlu0 %1307, %v1002
        %v1309 = vpop.permute.xlu0 %1308
        %v1312 = vunpack.c.l.s4 839922192
        %v1313 = vunpack.c.0.s8 %v1312
        %v1314 = vperm.slane %v1309, %v1313
        %1316 = vset.pattern.permute.xlu0 0
        %1317 = vperm.xlu0 %1316, %v1003
        %v1318 = vpop.permute.xlu0 %1317
        %v1321 = vunpack.c.l.s4 839922192
        %v1322 = vunpack.c.0.s8 %v1321
        %v1323 = vperm.slane %v1318, %v1322
        %1325 = vset.pattern.permute.xlu0 0
        %1326 = vperm.xlu0 %1325, %v1004
        %v1327 = vpop.permute.xlu0 %1326
        %v1330 = vunpack.c.l.s4 839922192
        %v1331 = vunpack.c.0.s8 %v1330
        %v1332 = vperm.slane %v1327, %v1331
        %1334 = vset.pattern.permute.xlu0 0
        %1335 = vperm.xlu0 %1334, %v1005
        %v1336 = vpop.permute.xlu0 %1335
        %v1339 = vunpack.c.l.s4 839922192
        %v1340 = vunpack.c.0.s8 %v1339
        %v1341 = vperm.slane %v1336, %v1340
        %1343 = vset.pattern.permute.xlu0 0
        %1344 = vperm.xlu0 %1343, %v1006
        %v1345 = vpop.permute.xlu0 %1344
        %v1348 = vunpack.c.l.s4 839922192
        %v1349 = vunpack.c.0.s8 %v1348
        %v1350 = vperm.slane %v1345, %v1349
        %1352 = vset.pattern.permute.xlu0 0
        %1353 = vperm.xlu0 %1352, %v1007
        %v1354 = vpop.permute.xlu0 %1353
        %v1357 = vunpack.c.l.s4 839922192
        %v1358 = vunpack.c.0.s8 %v1357
        %v1359 = vperm.slane %v1354, %v1358
        %1361 = vset.pattern.permute.xlu0 0
        %1362 = vperm.xlu0 %1361, %v1008
        %v1363 = vpop.permute.xlu0 %1362
        %v1366 = vunpack.c.l.s4 839922192
        %v1367 = vunpack.c.0.s8 %v1366
        %v1368 = vperm.slane %v1363, %v1367
        %1370 = vset.pattern.permute.xlu0 0
        %1371 = vperm.xlu0 %1370, %v1009
        %v1372 = vpop.permute.xlu0 %1371
        %v1375 = vunpack.c.l.s4 839922192
        %v1376 = vunpack.c.0.s8 %v1375
        %v1377 = vperm.slane %v1372, %v1376
        %1379 = vset.pattern.permute.xlu0 0
        %1380 = vperm.xlu0 %1379, %v1010
        %v1381 = vpop.permute.xlu0 %1380
        %v1384 = vunpack.c.l.s4 839922192
        %v1385 = vunpack.c.0.s8 %v1384
        %v1386 = vperm.slane %v1381, %v1385
        %1388 = vset.pattern.permute.xlu0 0
        %1389 = vperm.xlu0 %1388, %v1011
        %v1390 = vpop.permute.xlu0 %1389
        %v1393 = vunpack.c.l.s4 839922192
        %v1394 = vunpack.c.0.s8 %v1393
        %v1395 = vperm.slane %v1390, %v1394
        %1397 = vset.pattern.permute.xlu0 0
        %1398 = vperm.xlu0 %1397, %v1012
        %v1399 = vpop.permute.xlu0 %1398
        %v1402 = vunpack.c.l.s4 839922192
        %v1403 = vunpack.c.0.s8 %v1402
        %v1404 = vperm.slane %v1399, %v1403
        %1406 = vset.pattern.permute.xlu0 0
        %1407 = vperm.xlu0 %1406, %v1013
        %v1408 = vpop.permute.xlu0 %1407
        %v1411 = vunpack.c.l.s4 839922192
        %v1412 = vunpack.c.0.s8 %v1411
        %v1413 = vperm.slane %v1408, %v1412
        %1415 = vset.pattern.permute.xlu0 0
        %1416 = vperm.xlu0 %1415, %v1014
        %v1417 = vpop.permute.xlu0 %1416
        %v1420 = vunpack.c.l.s4 839922192
        %v1421 = vunpack.c.0.s8 %v1420
        %v1422 = vperm.slane %v1417, %v1421
        %1424 = vset.pattern.permute.xlu0 0
        %1425 = vperm.xlu0 %1424, %v1015
        %v1426 = vpop.permute.xlu0 %1425
        %v1429 = vunpack.c.l.s4 839922192
        %v1430 = vunpack.c.0.s8 %v1429
        %v1431 = vperm.slane %v1426, %v1430
        %1433 = vset.pattern.permute.xlu0 0
        %1434 = vperm.xlu0 %1433, %v1016
        %v1435 = vpop.permute.xlu0 %1434
        %v1438 = vunpack.c.l.s4 839922192
        %v1439 = vunpack.c.0.s8 %v1438
        %v1440 = vperm.slane %v1435, %v1439
        %1442 = vset.pattern.permute.xlu0 0
        %1443 = vperm.xlu0 %1442, %v1017
        %v1444 = vpop.permute.xlu0 %1443
        %v1447 = vunpack.c.l.s4 839922192
        %v1448 = vunpack.c.0.s8 %v1447
        %v1449 = vperm.slane %v1444, %v1448
        %1451 = vset.pattern.permute.xlu0 0
        %1452 = vperm.xlu0 %1451, %v1018
        %v1453 = vpop.permute.xlu0 %1452
        %v1456 = vunpack.c.l.s4 839922192
        %v1457 = vunpack.c.0.s8 %v1456
        %v1458 = vperm.slane %v1453, %v1457
        %1460 = vset.pattern.permute.xlu0 0
        %1461 = vperm.xlu0 %1460, %v1019
        %v1462 = vpop.permute.xlu0 %1461
        %v1465 = vunpack.c.l.s4 839922192
        %v1466 = vunpack.c.0.s8 %v1465
        %v1467 = vperm.slane %v1462, %v1466
        %1469 = vset.pattern.permute.xlu0 0
        %1470 = vperm.xlu0 %1469, %v1020
        %v1471 = vpop.permute.xlu0 %1470
        %v1474 = vunpack.c.l.s4 839922192
        %v1475 = vunpack.c.0.s8 %v1474
        %v1476 = vperm.slane %v1471, %v1475
        %1478 = vset.pattern.permute.xlu0 0
        %1479 = vperm.xlu0 %1478, %v1021
        %v1480 = vpop.permute.xlu0 %1479
        %v1483 = vunpack.c.l.s4 839922192
        %v1484 = vunpack.c.0.s8 %v1483
        %v1485 = vperm.slane %v1480, %v1484
        %1487 = vset.pattern.permute.xlu0 0
        %1488 = vperm.xlu0 %1487, %v1022
        %v1489 = vpop.permute.xlu0 %1488
        %v1492 = vunpack.c.l.s4 839922192
        %v1493 = vunpack.c.0.s8 %v1492
        %v1494 = vperm.slane %v1489, %v1493
        %1496 = vset.pattern.permute.xlu0 0
        %1497 = vperm.xlu0 %1496, %v1023
        %v1498 = vpop.permute.xlu0 %1497
        %v1501 = vunpack.c.l.s4 839922192
        %v1502 = vunpack.c.0.s8 %v1501
        %v1503 = vperm.slane %v1498, %v1502
        %1505 = vset.pattern.permute.xlu0 0
        %1506 = vperm.xlu0 %1505, %v1024
        %v1507 = vpop.permute.xlu0 %1506
        %v1510 = vunpack.c.l.s4 839922192
        %v1511 = vunpack.c.0.s8 %v1510
        %v1512 = vperm.slane %v1507, %v1511
        %1514 = vset.pattern.permute.xlu0 0
        %1515 = vperm.xlu0 %1514, %v1025
        %v1516 = vpop.permute.xlu0 %1515
        %v1519 = vunpack.c.l.s4 839922192
        %v1520 = vunpack.c.0.s8 %v1519
        %v1521 = vperm.slane %v1516, %v1520
        %1523 = vset.pattern.permute.xlu0 0
        %1524 = vperm.xlu0 %1523, %v1026
        %v1525 = vpop.permute.xlu0 %1524
        %v1528 = vunpack.c.l.s4 839922192
        %v1529 = vunpack.c.0.s8 %v1528
        %v1530 = vperm.slane %v1525, %v1529
        %1532 = vset.pattern.permute.xlu0 0
        %1533 = vperm.xlu0 %1532, %v1027
        %v1534 = vpop.permute.xlu0 %1533
        %v1537 = vunpack.c.l.s4 839922192
        %v1538 = vunpack.c.0.s8 %v1537
        %v1539 = vperm.slane %v1534, %v1538
        %1541 = vset.pattern.permute.xlu0 0
        %1542 = vperm.xlu0 %1541, %v1028
        %v1543 = vpop.permute.xlu0 %1542
        %v1546 = vunpack.c.l.s4 839922192
        %v1547 = vunpack.c.0.s8 %v1546
        %v1548 = vperm.slane %v1543, %v1547
        %1550 = vset.pattern.permute.xlu0 0
        %1551 = vperm.xlu0 %1550, %v1029
        %v1552 = vpop.permute.xlu0 %1551
        %v1555 = vunpack.c.l.s4 839922192
        %v1556 = vunpack.c.0.s8 %v1555
        %v1557 = vperm.slane %v1552, %v1556
        %1559 = vset.pattern.permute.xlu0 0
        %1560 = vperm.xlu0 %1559, %v1030
        %v1561 = vpop.permute.xlu0 %1560
        %v1564 = vunpack.c.l.s4 839922192
        %v1565 = vunpack.c.0.s8 %v1564
        %v1566 = vperm.slane %v1561, %v1565
        %1568 = vset.pattern.permute.xlu0 0
        %1569 = vperm.xlu0 %1568, %v1031
        %v1570 = vpop.permute.xlu0 %1569
        %v1573 = vunpack.c.l.s4 839922192
        %v1574 = vunpack.c.0.s8 %v1573
        %v1575 = vperm.slane %v1570, %v1574
        %1577 = vset.pattern.permute.xlu0 0
        %1578 = vperm.xlu0 %1577, %v1032
        %v1579 = vpop.permute.xlu0 %1578
        %v1582 = vunpack.c.l.s4 839922192
        %v1583 = vunpack.c.0.s8 %v1582
        %v1584 = vperm.slane %v1579, %v1583
        %1586 = vset.pattern.permute.xlu0 0
        %1587 = vperm.xlu0 %1586, %v1033
        %v1588 = vpop.permute.xlu0 %1587
        %v1591 = vunpack.c.l.s4 839922192
        %v1592 = vunpack.c.0.s8 %v1591
        %v1593 = vperm.slane %v1588, %v1592
        %1595 = vset.pattern.permute.xlu0 0
        %1596 = vperm.xlu0 %1595, %v1034
        %v1597 = vpop.permute.xlu0 %1596
        %v1600 = vunpack.c.l.s4 839922192
        %v1601 = vunpack.c.0.s8 %v1600
        %v1602 = vperm.slane %v1597, %v1601
        %1604 = vset.pattern.permute.xlu0 0
        %1605 = vperm.xlu0 %1604, %v1035
        %v1606 = vpop.permute.xlu0 %1605
        %v1609 = vunpack.c.l.s4 839922192
        %v1610 = vunpack.c.0.s8 %v1609
        %v1611 = vperm.slane %v1606, %v1610
        %v1612 = vunpack.c.l.bf16 %v844
        %v1613 = vunpack.c.h.bf16 %v844
        %v1614 = vunpack.c.l.bf16 %v845
        %v1615 = vunpack.c.h.bf16 %v845
        %v1616 = vunpack.c.l.bf16 %v846
        %v1617 = vunpack.c.h.bf16 %v846
        %v1618 = vunpack.c.l.bf16 %v847
        %v1619 = vunpack.c.h.bf16 %v847
        %v1620 = vunpack.c.l.bf16 %v848
        %v1621 = vunpack.c.h.bf16 %v848
        %v1622 = vunpack.c.l.bf16 %v849
        %v1623 = vunpack.c.h.bf16 %v849
        %v1624 = vunpack.c.l.bf16 %v850
        %v1625 = vunpack.c.h.bf16 %v850
        %v1626 = vunpack.c.l.bf16 %v851
        %v1627 = vunpack.c.h.bf16 %v851
        %v1628 = vunpack.c.l.bf16 %v852
        %v1629 = vunpack.c.h.bf16 %v852
        %v1630 = vunpack.c.l.bf16 %v853
        %v1631 = vunpack.c.h.bf16 %v853
        %v1632 = vunpack.c.l.bf16 %v854
        %v1633 = vunpack.c.h.bf16 %v854
        %v1634 = vunpack.c.l.bf16 %v855
        %v1635 = vunpack.c.h.bf16 %v855
        %v1636 = vunpack.c.l.bf16 %v856
        %v1637 = vunpack.c.h.bf16 %v856
        %v1638 = vunpack.c.l.bf16 %v857
        %v1639 = vunpack.c.h.bf16 %v857
        %v1640 = vunpack.c.l.bf16 %v858
        %v1641 = vunpack.c.h.bf16 %v858
        %v1642 = vunpack.c.l.bf16 %v859
        %v1643 = vunpack.c.h.bf16 %v859
        %v1644 = vunpack.c.l.bf16 %v860
        %v1645 = vunpack.c.h.bf16 %v860
        %v1646 = vunpack.c.l.bf16 %v861
        %v1647 = vunpack.c.h.bf16 %v861
        %v1648 = vunpack.c.l.bf16 %v862
        %v1649 = vunpack.c.h.bf16 %v862
        %v1650 = vunpack.c.l.bf16 %v863
        %v1651 = vunpack.c.h.bf16 %v863
        %v1652 = vunpack.c.l.bf16 %v864
        %v1653 = vunpack.c.h.bf16 %v864
        %v1654 = vunpack.c.l.bf16 %v865
        %v1655 = vunpack.c.h.bf16 %v865
        %v1656 = vunpack.c.l.bf16 %v866
        %v1657 = vunpack.c.h.bf16 %v866
        %v1658 = vunpack.c.l.bf16 %v867
        %v1659 = vunpack.c.h.bf16 %v867
        %v1660 = vunpack.c.l.bf16 %v868
        %v1661 = vunpack.c.h.bf16 %v868
        %v1662 = vunpack.c.l.bf16 %v869
        %v1663 = vunpack.c.h.bf16 %v869
        %v1664 = vunpack.c.l.bf16 %v870
        %v1665 = vunpack.c.h.bf16 %v870
        %v1666 = vunpack.c.l.bf16 %v871
        %v1667 = vunpack.c.h.bf16 %v871
        %v1668 = vunpack.c.l.bf16 %v872
        %v1669 = vunpack.c.h.bf16 %v872
        %v1670 = vunpack.c.l.bf16 %v873
        %v1671 = vunpack.c.h.bf16 %v873
        %v1672 = vunpack.c.l.bf16 %v874
        %v1673 = vunpack.c.h.bf16 %v874
        %v1674 = vunpack.c.l.bf16 %v875
        %v1675 = vunpack.c.h.bf16 %v875
        %v1676 = vunpack.c.l.bf16 %v876
        %v1677 = vunpack.c.h.bf16 %v876
        %v1678 = vunpack.c.l.bf16 %v877
        %v1679 = vunpack.c.h.bf16 %v877
        %v1680 = vunpack.c.l.bf16 %v878
        %v1681 = vunpack.c.h.bf16 %v878
        %v1682 = vunpack.c.l.bf16 %v879
        %v1683 = vunpack.c.h.bf16 %v879
        %v1684 = vunpack.c.l.bf16 %v880
        %v1685 = vunpack.c.h.bf16 %v880
        %v1686 = vunpack.c.l.bf16 %v881
        %v1687 = vunpack.c.h.bf16 %v881
        %v1688 = vunpack.c.l.bf16 %v882
        %v1689 = vunpack.c.h.bf16 %v882
        %v1690 = vunpack.c.l.bf16 %v883
        %v1691 = vunpack.c.h.bf16 %v883
        %v1692 = vunpack.c.l.bf16 %v884
        %v1693 = vunpack.c.h.bf16 %v884
        %v1694 = vunpack.c.l.bf16 %v885
        %v1695 = vunpack.c.h.bf16 %v885
        %v1696 = vunpack.c.l.bf16 %v886
        %v1697 = vunpack.c.h.bf16 %v886
        %v1698 = vunpack.c.l.bf16 %v887
        %v1699 = vunpack.c.h.bf16 %v887
        %v1700 = vunpack.c.l.bf16 %v888
        %v1701 = vunpack.c.h.bf16 %v888
        %v1702 = vunpack.c.l.bf16 %v889
        %v1703 = vunpack.c.h.bf16 %v889
        %v1704 = vunpack.c.l.bf16 %v890
        %v1705 = vunpack.c.h.bf16 %v890
        %v1706 = vunpack.c.l.bf16 %v891
        %v1707 = vunpack.c.h.bf16 %v891
        %v1708 = vunpack.c.l.bf16 %v892
        %v1709 = vunpack.c.h.bf16 %v892
        %v1710 = vunpack.c.l.bf16 %v893
        %v1711 = vunpack.c.h.bf16 %v893
        %v1712 = vunpack.c.l.bf16 %v894
        %v1713 = vunpack.c.h.bf16 %v894
        %v1714 = vunpack.c.l.bf16 %v895
        %v1715 = vunpack.c.h.bf16 %v895
        %v1716 = vunpack.c.l.bf16 %v896
        %v1717 = vunpack.c.h.bf16 %v896
        %v1718 = vunpack.c.l.bf16 %v897
        %v1719 = vunpack.c.h.bf16 %v897
        %v1720 = vunpack.c.l.bf16 %v898
        %v1721 = vunpack.c.h.bf16 %v898
        %v1722 = vunpack.c.l.bf16 %v899
        %v1723 = vunpack.c.h.bf16 %v899
        %v1724 = vunpack.c.l.bf16 %v900
        %v1725 = vunpack.c.h.bf16 %v900
        %v1726 = vunpack.c.l.bf16 %v901
        %v1727 = vunpack.c.h.bf16 %v901
        %v1728 = vunpack.c.l.bf16 %v902
        %v1729 = vunpack.c.h.bf16 %v902
        %v1730 = vunpack.c.l.bf16 %v903
        %v1731 = vunpack.c.h.bf16 %v903
        %v1732 = vunpack.c.l.bf16 %v904
        %v1733 = vunpack.c.h.bf16 %v904
        %v1734 = vunpack.c.l.bf16 %v905
        %v1735 = vunpack.c.h.bf16 %v905
        %v1736 = vunpack.c.l.bf16 %v906
        %v1737 = vunpack.c.h.bf16 %v906
        %v1738 = vunpack.c.l.bf16 %v907
        %v1739 = vunpack.c.h.bf16 %v907
        %v1740 = vunpack.c.l.bf16 %v1044
        %v1741 = vunpack.c.l.bf16 %v1053
        %v1742 = vunpack.c.l.bf16 %v1062
        %v1743 = vunpack.c.l.bf16 %v1071
        %v1744 = vunpack.c.l.bf16 %v1080
        %v1745 = vunpack.c.l.bf16 %v1089
        %v1746 = vunpack.c.l.bf16 %v1098
        %v1747 = vunpack.c.l.bf16 %v1107
        %v1748 = vunpack.c.l.bf16 %v1116
        %v1749 = vunpack.c.l.bf16 %v1125
        %v1750 = vunpack.c.l.bf16 %v1134
        %v1751 = vunpack.c.l.bf16 %v1143
        %v1752 = vunpack.c.l.bf16 %v1152
        %v1753 = vunpack.c.l.bf16 %v1161
        %v1754 = vunpack.c.l.bf16 %v1170
        %v1755 = vunpack.c.l.bf16 %v1179
        %v1756 = vunpack.c.l.bf16 %v1188
        %v1757 = vunpack.c.l.bf16 %v1197
        %v1758 = vunpack.c.l.bf16 %v1206
        %v1759 = vunpack.c.l.bf16 %v1215
        %v1760 = vunpack.c.l.bf16 %v1224
        %v1761 = vunpack.c.l.bf16 %v1233
        %v1762 = vunpack.c.l.bf16 %v1242
        %v1763 = vunpack.c.l.bf16 %v1251
        %v1764 = vunpack.c.l.bf16 %v1260
        %v1765 = vunpack.c.l.bf16 %v1269
        %v1766 = vunpack.c.l.bf16 %v1278
        %v1767 = vunpack.c.l.bf16 %v1287
        %v1768 = vunpack.c.l.bf16 %v1296
        %v1769 = vunpack.c.l.bf16 %v1305
        %v1770 = vunpack.c.l.bf16 %v1314
        %v1771 = vunpack.c.l.bf16 %v1323
        %v1772 = vunpack.c.l.bf16 %v1332
        %v1773 = vunpack.c.l.bf16 %v1341
        %v1774 = vunpack.c.l.bf16 %v1350
        %v1775 = vunpack.c.l.bf16 %v1359
        %v1776 = vunpack.c.l.bf16 %v1368
        %v1777 = vunpack.c.l.bf16 %v1377
        %v1778 = vunpack.c.l.bf16 %v1386
        %v1779 = vunpack.c.l.bf16 %v1395
        %v1780 = vunpack.c.l.bf16 %v1404
        %v1781 = vunpack.c.l.bf16 %v1413
        %v1782 = vunpack.c.l.bf16 %v1422
        %v1783 = vunpack.c.l.bf16 %v1431
        %v1784 = vunpack.c.l.bf16 %v1440
        %v1785 = vunpack.c.l.bf16 %v1449
        %v1786 = vunpack.c.l.bf16 %v1458
        %v1787 = vunpack.c.l.bf16 %v1467
        %v1788 = vunpack.c.l.bf16 %v1476
        %v1789 = vunpack.c.l.bf16 %v1485
        %v1790 = vunpack.c.l.bf16 %v1494
        %v1791 = vunpack.c.l.bf16 %v1503
        %v1792 = vunpack.c.l.bf16 %v1512
        %v1793 = vunpack.c.l.bf16 %v1521
        %v1794 = vunpack.c.l.bf16 %v1530
        %v1795 = vunpack.c.l.bf16 %v1539
        %v1796 = vunpack.c.l.bf16 %v1548
        %v1797 = vunpack.c.l.bf16 %v1557
        %v1798 = vunpack.c.l.bf16 %v1566
        %v1799 = vunpack.c.l.bf16 %v1575
        %v1800 = vunpack.c.l.bf16 %v1584
        %v1801 = vunpack.c.l.bf16 %v1593
        %v1802 = vunpack.c.l.bf16 %v1602
        %v1803 = vunpack.c.l.bf16 %v1611
        %v1804 = vmul.f32 %v1612, %v1740
        %v1805 = vmul.f32 %v1613, %v1740
        %v1806 = vmul.f32 %v1614, %v1741
        %v1807 = vmul.f32 %v1615, %v1741
        %v1808 = vmul.f32 %v1616, %v1742
        %v1809 = vmul.f32 %v1617, %v1742
        %v1810 = vmul.f32 %v1618, %v1743
        %v1811 = vmul.f32 %v1619, %v1743
        %v1812 = vmul.f32 %v1620, %v1744
        %v1813 = vmul.f32 %v1621, %v1744
        %v1814 = vmul.f32 %v1622, %v1745
        %v1815 = vmul.f32 %v1623, %v1745
        %v1816 = vmul.f32 %v1624, %v1746
        %v1817 = vmul.f32 %v1625, %v1746
        %v1818 = vmul.f32 %v1626, %v1747
        %v1819 = vmul.f32 %v1627, %v1747
        %v1820 = vmul.f32 %v1628, %v1748
        %v1821 = vmul.f32 %v1629, %v1748
        %v1822 = vmul.f32 %v1630, %v1749
        %v1823 = vmul.f32 %v1631, %v1749
        %v1824 = vmul.f32 %v1632, %v1750
        %v1825 = vmul.f32 %v1633, %v1750
        %v1826 = vmul.f32 %v1634, %v1751
        %v1827 = vmul.f32 %v1635, %v1751
        %v1828 = vmul.f32 %v1636, %v1752
        %v1829 = vmul.f32 %v1637, %v1752
        %v1830 = vmul.f32 %v1638, %v1753
        %v1831 = vmul.f32 %v1639, %v1753
        %v1832 = vmul.f32 %v1640, %v1754
        %v1833 = vmul.f32 %v1641, %v1754
        %v1834 = vmul.f32 %v1642, %v1755
        %v1835 = vmul.f32 %v1643, %v1755
        %v1836 = vmul.f32 %v1644, %v1756
        %v1837 = vmul.f32 %v1645, %v1756
        %v1838 = vmul.f32 %v1646, %v1757
        %v1839 = vmul.f32 %v1647, %v1757
        %v1840 = vmul.f32 %v1648, %v1758
        %v1841 = vmul.f32 %v1649, %v1758
        %v1842 = vmul.f32 %v1650, %v1759
        %v1843 = vmul.f32 %v1651, %v1759
        %v1844 = vmul.f32 %v1652, %v1760
        %v1845 = vmul.f32 %v1653, %v1760
        %v1846 = vmul.f32 %v1654, %v1761
        %v1847 = vmul.f32 %v1655, %v1761
        %v1848 = vmul.f32 %v1656, %v1762
        %v1849 = vmul.f32 %v1657, %v1762
        %v1850 = vmul.f32 %v1658, %v1763
        %v1851 = vmul.f32 %v1659, %v1763
        %v1852 = vmul.f32 %v1660, %v1764
        %v1853 = vmul.f32 %v1661, %v1764
        %v1854 = vmul.f32 %v1662, %v1765
        %v1855 = vmul.f32 %v1663, %v1765
        %v1856 = vmul.f32 %v1664, %v1766
        %v1857 = vmul.f32 %v1665, %v1766
        %v1858 = vmul.f32 %v1666, %v1767
        %v1859 = vmul.f32 %v1667, %v1767
        %v1860 = vmul.f32 %v1668, %v1768
        %v1861 = vmul.f32 %v1669, %v1768
        %v1862 = vmul.f32 %v1670, %v1769
        %v1863 = vmul.f32 %v1671, %v1769
        %v1864 = vmul.f32 %v1672, %v1770
        %v1865 = vmul.f32 %v1673, %v1770
        %v1866 = vmul.f32 %v1674, %v1771
        %v1867 = vmul.f32 %v1675, %v1771
        %v1868 = vmul.f32 %v1676, %v1772
        %v1869 = vmul.f32 %v1677, %v1772
        %v1870 = vmul.f32 %v1678, %v1773
        %v1871 = vmul.f32 %v1679, %v1773
        %v1872 = vmul.f32 %v1680, %v1774
        %v1873 = vmul.f32 %v1681, %v1774
        %v1874 = vmul.f32 %v1682, %v1775
        %v1875 = vmul.f32 %v1683, %v1775
        %v1876 = vmul.f32 %v1684, %v1776
        %v1877 = vmul.f32 %v1685, %v1776
        %v1878 = vmul.f32 %v1686, %v1777
        %v1879 = vmul.f32 %v1687, %v1777
        %v1880 = vmul.f32 %v1688, %v1778
        %v1881 = vmul.f32 %v1689, %v1778
        %v1882 = vmul.f32 %v1690, %v1779
        %v1883 = vmul.f32 %v1691, %v1779
        %v1884 = vmul.f32 %v1692, %v1780
        %v1885 = vmul.f32 %v1693, %v1780
        %v1886 = vmul.f32 %v1694, %v1781
        %v1887 = vmul.f32 %v1695, %v1781
        %v1888 = vmul.f32 %v1696, %v1782
        %v1889 = vmul.f32 %v1697, %v1782
        %v1890 = vmul.f32 %v1698, %v1783
        %v1891 = vmul.f32 %v1699, %v1783
        %v1892 = vmul.f32 %v1700, %v1784
        %v1893 = vmul.f32 %v1701, %v1784
        %v1894 = vmul.f32 %v1702, %v1785
        %v1895 = vmul.f32 %v1703, %v1785
        %v1896 = vmul.f32 %v1704, %v1786
        %v1897 = vmul.f32 %v1705, %v1786
        %v1898 = vmul.f32 %v1706, %v1787
        %v1899 = vmul.f32 %v1707, %v1787
        %v1900 = vmul.f32 %v1708, %v1788
        %v1901 = vmul.f32 %v1709, %v1788
        %v1902 = vmul.f32 %v1710, %v1789
        %v1903 = vmul.f32 %v1711, %v1789
        %v1904 = vmul.f32 %v1712, %v1790
        %v1905 = vmul.f32 %v1713, %v1790
        %v1906 = vmul.f32 %v1714, %v1791
        %v1907 = vmul.f32 %v1715, %v1791
        %v1908 = vmul.f32 %v1716, %v1792
        %v1909 = vmul.f32 %v1717, %v1792
        %v1910 = vmul.f32 %v1718, %v1793
        %v1911 = vmul.f32 %v1719, %v1793
        %v1912 = vmul.f32 %v1720, %v1794
        %v1913 = vmul.f32 %v1721, %v1794
        %v1914 = vmul.f32 %v1722, %v1795
        %v1915 = vmul.f32 %v1723, %v1795
        %v1916 = vmul.f32 %v1724, %v1796
        %v1917 = vmul.f32 %v1725, %v1796
        %v1918 = vmul.f32 %v1726, %v1797
        %v1919 = vmul.f32 %v1727, %v1797
        %v1920 = vmul.f32 %v1728, %v1798
        %v1921 = vmul.f32 %v1729, %v1798
        %v1922 = vmul.f32 %v1730, %v1799
        %v1923 = vmul.f32 %v1731, %v1799
        %v1924 = vmul.f32 %v1732, %v1800
        %v1925 = vmul.f32 %v1733, %v1800
        %v1926 = vmul.f32 %v1734, %v1801
        %v1927 = vmul.f32 %v1735, %v1801
        %v1928 = vmul.f32 %v1736, %v1802
        %v1929 = vmul.f32 %v1737, %v1802
        %v1930 = vmul.f32 %v1738, %v1803
        %v1931 = vmul.f32 %v1739, %v1803
        %v1932 = vpack.c.bf16 %v1806, %v1804
        %v1933 = vpack.c.bf16 %v1807, %v1805
        %v1934 = vpack.c.bf16 %v1810, %v1808
        %v1935 = vpack.c.bf16 %v1811, %v1809
        %v1936 = vpack.c.bf16 %v1814, %v1812
        %v1937 = vpack.c.bf16 %v1815, %v1813
        %v1938 = vpack.c.bf16 %v1818, %v1816
        %v1939 = vpack.c.bf16 %v1819, %v1817
        %v1940 = vpack.c.bf16 %v1822, %v1820
        %v1941 = vpack.c.bf16 %v1823, %v1821
        %v1942 = vpack.c.bf16 %v1826, %v1824
        %v1943 = vpack.c.bf16 %v1827, %v1825
        %v1944 = vpack.c.bf16 %v1830, %v1828
        %v1945 = vpack.c.bf16 %v1831, %v1829
        %v1946 = vpack.c.bf16 %v1834, %v1832
        %v1947 = vpack.c.bf16 %v1835, %v1833
        %v1948 = vpack.c.bf16 %v1838, %v1836
        %v1949 = vpack.c.bf16 %v1839, %v1837
        %v1950 = vpack.c.bf16 %v1842, %v1840
        %v1951 = vpack.c.bf16 %v1843, %v1841
        %v1952 = vpack.c.bf16 %v1846, %v1844
        %v1953 = vpack.c.bf16 %v1847, %v1845
        %v1954 = vpack.c.bf16 %v1850, %v1848
        %v1955 = vpack.c.bf16 %v1851, %v1849
        %v1956 = vpack.c.bf16 %v1854, %v1852
        %v1957 = vpack.c.bf16 %v1855, %v1853
        %v1958 = vpack.c.bf16 %v1858, %v1856
        %v1959 = vpack.c.bf16 %v1859, %v1857
        %v1960 = vpack.c.bf16 %v1862, %v1860
        %v1961 = vpack.c.bf16 %v1863, %v1861
        %v1962 = vpack.c.bf16 %v1866, %v1864
        %v1963 = vpack.c.bf16 %v1867, %v1865
        %v1964 = vpack.c.bf16 %v1870, %v1868
        %v1965 = vpack.c.bf16 %v1871, %v1869
        %v1966 = vpack.c.bf16 %v1874, %v1872
        %v1967 = vpack.c.bf16 %v1875, %v1873
        %v1968 = vpack.c.bf16 %v1878, %v1876
        %v1969 = vpack.c.bf16 %v1879, %v1877
        %v1970 = vpack.c.bf16 %v1882, %v1880
        %v1971 = vpack.c.bf16 %v1883, %v1881
        %v1972 = vpack.c.bf16 %v1886, %v1884
        %v1973 = vpack.c.bf16 %v1887, %v1885
        %v1974 = vpack.c.bf16 %v1890, %v1888
        %v1975 = vpack.c.bf16 %v1891, %v1889
        %v1976 = vpack.c.bf16 %v1894, %v1892
        %v1977 = vpack.c.bf16 %v1895, %v1893
        %v1978 = vpack.c.bf16 %v1898, %v1896
        %v1979 = vpack.c.bf16 %v1899, %v1897
        %v1980 = vpack.c.bf16 %v1902, %v1900
        %v1981 = vpack.c.bf16 %v1903, %v1901
        %v1982 = vpack.c.bf16 %v1906, %v1904
        %v1983 = vpack.c.bf16 %v1907, %v1905
        %v1984 = vpack.c.bf16 %v1910, %v1908
        %v1985 = vpack.c.bf16 %v1911, %v1909
        %v1986 = vpack.c.bf16 %v1914, %v1912
        %v1987 = vpack.c.bf16 %v1915, %v1913
        %v1988 = vpack.c.bf16 %v1918, %v1916
        %v1989 = vpack.c.bf16 %v1919, %v1917
        %v1990 = vpack.c.bf16 %v1922, %v1920
        %v1991 = vpack.c.bf16 %v1923, %v1921
        %v1992 = vpack.c.bf16 %v1926, %v1924
        %v1993 = vpack.c.bf16 %v1927, %v1925
        %v1994 = vpack.c.bf16 %v1930, %v1928
        %v1995 = vpack.c.bf16 %v1931, %v1929
        %v1996 = vld [vmem:[#allocation2] sm:$0xff]
        %v1997 = vld [vmem:[#allocation2 + $0x8] sm:$0xff]
        %v1998 = vunpack.c.l.bf16 %v1932
        %v1999 = vunpack.c.l.bf16 %v1933
        %v2000 = vunpack.c.h.bf16 %v1932
        %v2001 = vunpack.c.h.bf16 %v1933
        %v2002 = vunpack.c.l.bf16 %v1934
        %v2003 = vunpack.c.l.bf16 %v1935
        %v2004 = vunpack.c.h.bf16 %v1934
        %v2005 = vunpack.c.h.bf16 %v1935
        %v2006 = vunpack.c.l.bf16 %v1936
        %v2007 = vunpack.c.l.bf16 %v1937
        %v2008 = vunpack.c.h.bf16 %v1936
        %v2009 = vunpack.c.h.bf16 %v1937
        %v2010 = vunpack.c.l.bf16 %v1938
        %v2011 = vunpack.c.l.bf16 %v1939
        %v2012 = vunpack.c.h.bf16 %v1938
        %v2013 = vunpack.c.h.bf16 %v1939
        %v2014 = vunpack.c.l.bf16 %v1940
        %v2015 = vunpack.c.l.bf16 %v1941
        %v2016 = vunpack.c.h.bf16 %v1940
        %v2017 = vunpack.c.h.bf16 %v1941
        %v2018 = vunpack.c.l.bf16 %v1942
        %v2019 = vunpack.c.l.bf16 %v1943
        %v2020 = vunpack.c.h.bf16 %v1942
        %v2021 = vunpack.c.h.bf16 %v1943
        %v2022 = vunpack.c.l.bf16 %v1944
        %v2023 = vunpack.c.l.bf16 %v1945
        %v2024 = vunpack.c.h.bf16 %v1944
        %v2025 = vunpack.c.h.bf16 %v1945
        %v2026 = vunpack.c.l.bf16 %v1946
        %v2027 = vunpack.c.l.bf16 %v1947
        %v2028 = vunpack.c.h.bf16 %v1946
        %v2029 = vunpack.c.h.bf16 %v1947
        %v2030 = vunpack.c.l.bf16 %v1948
        %v2031 = vunpack.c.l.bf16 %v1949
        %v2032 = vunpack.c.h.bf16 %v1948
        %v2033 = vunpack.c.h.bf16 %v1949
        %v2034 = vunpack.c.l.bf16 %v1950
        %v2035 = vunpack.c.l.bf16 %v1951
        %v2036 = vunpack.c.h.bf16 %v1950
        %v2037 = vunpack.c.h.bf16 %v1951
        %v2038 = vunpack.c.l.bf16 %v1952
        %v2039 = vunpack.c.l.bf16 %v1953
        %v2040 = vunpack.c.h.bf16 %v1952
        %v2041 = vunpack.c.h.bf16 %v1953
        %v2042 = vunpack.c.l.bf16 %v1954
        %v2043 = vunpack.c.l.bf16 %v1955
        %v2044 = vunpack.c.h.bf16 %v1954
        %v2045 = vunpack.c.h.bf16 %v1955
        %v2046 = vunpack.c.l.bf16 %v1956
        %v2047 = vunpack.c.l.bf16 %v1957
        %v2048 = vunpack.c.h.bf16 %v1956
        %v2049 = vunpack.c.h.bf16 %v1957
        %v2050 = vunpack.c.l.bf16 %v1958
        %v2051 = vunpack.c.l.bf16 %v1959
        %v2052 = vunpack.c.h.bf16 %v1958
        %v2053 = vunpack.c.h.bf16 %v1959
        %v2054 = vunpack.c.l.bf16 %v1960
        %v2055 = vunpack.c.l.bf16 %v1961
        %v2056 = vunpack.c.h.bf16 %v1960
        %v2057 = vunpack.c.h.bf16 %v1961
        %v2058 = vunpack.c.l.bf16 %v1962
        %v2059 = vunpack.c.l.bf16 %v1963
        %v2060 = vunpack.c.h.bf16 %v1962
        %v2061 = vunpack.c.h.bf16 %v1963
        %v2062 = vunpack.c.l.bf16 %v1964
        %v2063 = vunpack.c.l.bf16 %v1965
        %v2064 = vunpack.c.h.bf16 %v1964
        %v2065 = vunpack.c.h.bf16 %v1965
        %v2066 = vunpack.c.l.bf16 %v1966
        %v2067 = vunpack.c.l.bf16 %v1967
        %v2068 = vunpack.c.h.bf16 %v1966
        %v2069 = vunpack.c.h.bf16 %v1967
        %v2070 = vunpack.c.l.bf16 %v1968
        %v2071 = vunpack.c.l.bf16 %v1969
        %v2072 = vunpack.c.h.bf16 %v1968
        %v2073 = vunpack.c.h.bf16 %v1969
        %v2074 = vunpack.c.l.bf16 %v1970
        %v2075 = vunpack.c.l.bf16 %v1971
        %v2076 = vunpack.c.h.bf16 %v1970
        %v2077 = vunpack.c.h.bf16 %v1971
        %v2078 = vunpack.c.l.bf16 %v1972
        %v2079 = vunpack.c.l.bf16 %v1973
        %v2080 = vunpack.c.h.bf16 %v1972
        %v2081 = vunpack.c.h.bf16 %v1973
        %v2082 = vunpack.c.l.bf16 %v1974
        %v2083 = vunpack.c.l.bf16 %v1975
        %v2084 = vunpack.c.h.bf16 %v1974
        %v2085 = vunpack.c.h.bf16 %v1975
        %v2086 = vunpack.c.l.bf16 %v1976
        %v2087 = vunpack.c.l.bf16 %v1977
        %v2088 = vunpack.c.h.bf16 %v1976
        %v2089 = vunpack.c.h.bf16 %v1977
        %v2090 = vunpack.c.l.bf16 %v1978
        %v2091 = vunpack.c.l.bf16 %v1979
        %v2092 = vunpack.c.h.bf16 %v1978
        %v2093 = vunpack.c.h.bf16 %v1979
        %v2094 = vunpack.c.l.bf16 %v1980
        %v2095 = vunpack.c.l.bf16 %v1981
        %v2096 = vunpack.c.h.bf16 %v1980
        %v2097 = vunpack.c.h.bf16 %v1981
        %v2098 = vunpack.c.l.bf16 %v1982
        %v2099 = vunpack.c.l.bf16 %v1983
        %v2100 = vunpack.c.h.bf16 %v1982
        %v2101 = vunpack.c.h.bf16 %v1983
        %v2102 = vunpack.c.l.bf16 %v1984
        %v2103 = vunpack.c.l.bf16 %v1985
        %v2104 = vunpack.c.h.bf16 %v1984
        %v2105 = vunpack.c.h.bf16 %v1985
        %v2106 = vunpack.c.l.bf16 %v1986
        %v2107 = vunpack.c.l.bf16 %v1987
        %v2108 = vunpack.c.h.bf16 %v1986
        %v2109 = vunpack.c.h.bf16 %v1987
        %v2110 = vunpack.c.l.bf16 %v1988
        %v2111 = vunpack.c.l.bf16 %v1989
        %v2112 = vunpack.c.h.bf16 %v1988
        %v2113 = vunpack.c.h.bf16 %v1989
        %v2114 = vunpack.c.l.bf16 %v1990
        %v2115 = vunpack.c.l.bf16 %v1991
        %v2116 = vunpack.c.h.bf16 %v1990
        %v2117 = vunpack.c.h.bf16 %v1991
        %v2118 = vunpack.c.l.bf16 %v1992
        %v2119 = vunpack.c.l.bf16 %v1993
        %v2120 = vunpack.c.h.bf16 %v1992
        %v2121 = vunpack.c.h.bf16 %v1993
        %v2122 = vunpack.c.l.bf16 %v1994
        %v2123 = vunpack.c.l.bf16 %v1995
        %v2124 = vunpack.c.h.bf16 %v1994
        %v2125 = vunpack.c.h.bf16 %v1995
        %v2126 = vadd.f32 %v1998, %v2000
        %v2127 = vadd.f32 %v2126, %v2002
        %v2128 = vadd.f32 %v2127, %v2004
        %v2129 = vadd.f32 %v2128, %v2006
        %v2130 = vadd.f32 %v2129, %v2008
        %v2131 = vadd.f32 %v2130, %v2010
        %v2132 = vadd.f32 %v2131, %v2012
        %v2133 = vrot.slane %v2132, 4
        %v2134 = vadd.f32 %v2132, %v2133
        %v2135 = vrot.slane %v2134, 2
        %v2136 = vadd.f32 %v2134, %v2135
        %v2137 = vrot.slane %v2136, 1
        %v2138 = vadd.f32 %v2136, %v2137
        %v2139 = vadd.f32 %v1999, %v2001
        %v2140 = vadd.f32 %v2139, %v2003
        %v2141 = vadd.f32 %v2140, %v2005
        %v2142 = vadd.f32 %v2141, %v2007
        %v2143 = vadd.f32 %v2142, %v2009
        %v2144 = vadd.f32 %v2143, %v2011
        %v2145 = vadd.f32 %v2144, %v2013
        %v2146 = vrot.slane %v2145, 4
        %v2147 = vadd.f32 %v2145, %v2146
        %v2148 = vrot.slane %v2147, 2
        %v2149 = vadd.f32 %v2147, %v2148
        %v2150 = vrot.slane %v2149, 1
        %v2151 = vadd.f32 %v2149, %v2150
        %v2152 = vadd.f32 %v2014, %v2016
        %v2153 = vadd.f32 %v2152, %v2018
        %v2154 = vadd.f32 %v2153, %v2020
        %v2155 = vadd.f32 %v2154, %v2022
        %v2156 = vadd.f32 %v2155, %v2024
        %v2157 = vadd.f32 %v2156, %v2026
        %v2158 = vadd.f32 %v2157, %v2028
        %v2159 = vrot.slane %v2158, 4
        %v2160 = vadd.f32 %v2158, %v2159
        %v2161 = vrot.slane %v2160, 2
        %v2162 = vadd.f32 %v2160, %v2161
        %v2163 = vrot.slane %v2162, 1
        %v2164 = vadd.f32 %v2162, %v2163
        %v2165 = vadd.f32 %v2015, %v2017
        %v2166 = vadd.f32 %v2165, %v2019
        %v2167 = vadd.f32 %v2166, %v2021
        %v2168 = vadd.f32 %v2167, %v2023
        %v2169 = vadd.f32 %v2168, %v2025
        %v2170 = vadd.f32 %v2169, %v2027
        %v2171 = vadd.f32 %v2170, %v2029
        %v2172 = vrot.slane %v2171, 4
        %v2173 = vadd.f32 %v2171, %v2172
        %v2174 = vrot.slane %v2173, 2
        %v2175 = vadd.f32 %v2173, %v2174
        %v2176 = vrot.slane %v2175, 1
        %v2177 = vadd.f32 %v2175, %v2176
        %v2178 = vadd.f32 %v2030, %v2032
        %v2179 = vadd.f32 %v2178, %v2034
        %v2180 = vadd.f32 %v2179, %v2036
        %v2181 = vadd.f32 %v2180, %v2038
        %v2182 = vadd.f32 %v2181, %v2040
        %v2183 = vadd.f32 %v2182, %v2042
        %v2184 = vadd.f32 %v2183, %v2044
        %v2185 = vrot.slane %v2184, 4
        %v2186 = vadd.f32 %v2184, %v2185
        %v2187 = vrot.slane %v2186, 2
        %v2188 = vadd.f32 %v2186, %v2187
        %v2189 = vrot.slane %v2188, 1
        %v2190 = vadd.f32 %v2188, %v2189
        %v2191 = vadd.f32 %v2031, %v2033
        %v2192 = vadd.f32 %v2191, %v2035
        %v2193 = vadd.f32 %v2192, %v2037
        %v2194 = vadd.f32 %v2193, %v2039
        %v2195 = vadd.f32 %v2194, %v2041
        %v2196 = vadd.f32 %v2195, %v2043
        %v2197 = vadd.f32 %v2196, %v2045
        %v2198 = vrot.slane %v2197, 4
        %v2199 = vadd.f32 %v2197, %v2198
        %v2200 = vrot.slane %v2199, 2
        %v2201 = vadd.f32 %v2199, %v2200
        %v2202 = vrot.slane %v2201, 1
        %v2203 = vadd.f32 %v2201, %v2202
        %v2204 = vadd.f32 %v2046, %v2048
        %v2205 = vadd.f32 %v2204, %v2050
        %v2206 = vadd.f32 %v2205, %v2052
        %v2207 = vadd.f32 %v2206, %v2054
        %v2208 = vadd.f32 %v2207, %v2056
        %v2209 = vadd.f32 %v2208, %v2058
        %v2210 = vadd.f32 %v2209, %v2060
        %v2211 = vrot.slane %v2210, 4
        %v2212 = vadd.f32 %v2210, %v2211
        %v2213 = vrot.slane %v2212, 2
        %v2214 = vadd.f32 %v2212, %v2213
        %v2215 = vrot.slane %v2214, 1
        %v2216 = vadd.f32 %v2214, %v2215
        %v2217 = vadd.f32 %v2047, %v2049
        %v2218 = vadd.f32 %v2217, %v2051
        %v2219 = vadd.f32 %v2218, %v2053
        %v2220 = vadd.f32 %v2219, %v2055
        %v2221 = vadd.f32 %v2220, %v2057
        %v2222 = vadd.f32 %v2221, %v2059
        %v2223 = vadd.f32 %v2222, %v2061
        %v2224 = vrot.slane %v2223, 4
        %v2225 = vadd.f32 %v2223, %v2224
        %v2226 = vrot.slane %v2225, 2
        %v2227 = vadd.f32 %v2225, %v2226
        %v2228 = vrot.slane %v2227, 1
        %v2229 = vadd.f32 %v2227, %v2228
        %v2230 = vadd.f32 %v2062, %v2064
        %v2231 = vadd.f32 %v2230, %v2066
        %v2232 = vadd.f32 %v2231, %v2068
        %v2233 = vadd.f32 %v2232, %v2070
        %v2234 = vadd.f32 %v2233, %v2072
        %v2235 = vadd.f32 %v2234, %v2074
        %v2236 = vadd.f32 %v2235, %v2076
        %v2237 = vrot.slane %v2236, 4
        %v2238 = vadd.f32 %v2236, %v2237
        %v2239 = vrot.slane %v2238, 2
        %v2240 = vadd.f32 %v2238, %v2239
        %v2241 = vrot.slane %v2240, 1
        %v2242 = vadd.f32 %v2240, %v2241
        %v2243 = vadd.f32 %v2063, %v2065
        %v2244 = vadd.f32 %v2243, %v2067
        %v2245 = vadd.f32 %v2244, %v2069
        %v2246 = vadd.f32 %v2245, %v2071
        %v2247 = vadd.f32 %v2246, %v2073
        %v2248 = vadd.f32 %v2247, %v2075
        %v2249 = vadd.f32 %v2248, %v2077
        %v2250 = vrot.slane %v2249, 4
        %v2251 = vadd.f32 %v2249, %v2250
        %v2252 = vrot.slane %v2251, 2
        %v2253 = vadd.f32 %v2251, %v2252
        %v2254 = vrot.slane %v2253, 1
        %v2255 = vadd.f32 %v2253, %v2254
        %v2256 = vadd.f32 %v2078, %v2080
        %v2257 = vadd.f32 %v2256, %v2082
        %v2258 = vadd.f32 %v2257, %v2084
        %v2259 = vadd.f32 %v2258, %v2086
        %v2260 = vadd.f32 %v2259, %v2088
        %v2261 = vadd.f32 %v2260, %v2090
        %v2262 = vadd.f32 %v2261, %v2092
        %v2263 = vrot.slane %v2262, 4
        %v2264 = vadd.f32 %v2262, %v2263
        %v2265 = vrot.slane %v2264, 2
        %v2266 = vadd.f32 %v2264, %v2265
        %v2267 = vrot.slane %v2266, 1
        %v2268 = vadd.f32 %v2266, %v2267
        %v2269 = vadd.f32 %v2079, %v2081
        %v2270 = vadd.f32 %v2269, %v2083
        %v2271 = vadd.f32 %v2270, %v2085
        %v2272 = vadd.f32 %v2271, %v2087
        %v2273 = vadd.f32 %v2272, %v2089
        %v2274 = vadd.f32 %v2273, %v2091
        %v2275 = vadd.f32 %v2274, %v2093
        %v2276 = vrot.slane %v2275, 4
        %v2277 = vadd.f32 %v2275, %v2276
        %v2278 = vrot.slane %v2277, 2
        %v2279 = vadd.f32 %v2277, %v2278
        %v2280 = vrot.slane %v2279, 1
        %v2281 = vadd.f32 %v2279, %v2280
        %v2282 = vadd.f32 %v2094, %v2096
        %v2283 = vadd.f32 %v2282, %v2098
        %v2284 = vadd.f32 %v2283, %v2100
        %v2285 = vadd.f32 %v2284, %v2102
        %v2286 = vadd.f32 %v2285, %v2104
        %v2287 = vadd.f32 %v2286, %v2106
        %v2288 = vadd.f32 %v2287, %v2108
        %v2289 = vrot.slane %v2288, 4
        %v2290 = vadd.f32 %v2288, %v2289
        %v2291 = vrot.slane %v2290, 2
        %v2292 = vadd.f32 %v2290, %v2291
        %v2293 = vrot.slane %v2292, 1
        %v2294 = vadd.f32 %v2292, %v2293
        %v2295 = vadd.f32 %v2095, %v2097
        %v2296 = vadd.f32 %v2295, %v2099
        %v2297 = vadd.f32 %v2296, %v2101
        %v2298 = vadd.f32 %v2297, %v2103
        %v2299 = vadd.f32 %v2298, %v2105
        %v2300 = vadd.f32 %v2299, %v2107
        %v2301 = vadd.f32 %v2300, %v2109
        %v2302 = vrot.slane %v2301, 4
        %v2303 = vadd.f32 %v2301, %v2302
        %v2304 = vrot.slane %v2303, 2
        %v2305 = vadd.f32 %v2303, %v2304
        %v2306 = vrot.slane %v2305, 1
        %v2307 = vadd.f32 %v2305, %v2306
        %v2308 = vadd.f32 %v2110, %v2112
        %v2309 = vadd.f32 %v2308, %v2114
        %v2310 = vadd.f32 %v2309, %v2116
        %v2311 = vadd.f32 %v2310, %v2118
        %v2312 = vadd.f32 %v2311, %v2120
        %v2313 = vadd.f32 %v2312, %v2122
        %v2314 = vadd.f32 %v2313, %v2124
        %v2315 = vrot.slane %v2314, 4
        %v2316 = vadd.f32 %v2314, %v2315
        %v2317 = vrot.slane %v2316, 2
        %v2318 = vadd.f32 %v2316, %v2317
        %v2319 = vrot.slane %v2318, 1
        %v2320 = vadd.f32 %v2318, %v2319
        %v2321 = vadd.f32 %v2111, %v2113
        %v2322 = vadd.f32 %v2321, %v2115
        %v2323 = vadd.f32 %v2322, %v2117
        %v2324 = vadd.f32 %v2323, %v2119
        %v2325 = vadd.f32 %v2324, %v2121
        %v2326 = vadd.f32 %v2325, %v2123
        %v2327 = vadd.f32 %v2326, %v2125
        %v2328 = vrot.slane %v2327, 4
        %v2329 = vadd.f32 %v2327, %v2328
        %v2330 = vrot.slane %v2329, 2
        %v2331 = vadd.f32 %v2329, %v2330
        %v2332 = vrot.slane %v2331, 1
        %v2333 = vadd.f32 %v2331, %v2332
        %vm2350 = vcmask 1041409
        %v2351 = vsel %vm2350, %v2164, %v2138
        %vm2352 = vcmask 1042434
        %v2353 = vsel %vm2352, %v2190, %v2351
        %vm2354 = vcmask 1043459
        %v2355 = vsel %vm2354, %v2216, %v2353
        %vm2356 = vcmask 1044484
        %v2357 = vsel %vm2356, %v2242, %v2355
        %vm2358 = vcmask 1045509
        %v2359 = vsel %vm2358, %v2268, %v2357
        %vm2360 = vcmask 1046534
        %v2361 = vsel %vm2360, %v2294, %v2359
        %vm2362 = vcmask 1047559
        %v2363 = vsel %vm2362, %v2320, %v2361
        %v2364 = vsel %vm2350, %v2177, %v2151
        %v2365 = vsel %vm2352, %v2203, %v2364
        %v2366 = vsel %vm2354, %v2229, %v2365
        %v2367 = vsel %vm2356, %v2255, %v2366
        %v2368 = vsel %vm2358, %v2281, %v2367
        %v2369 = vsel %vm2360, %v2307, %v2368
        %v2370 = vsel %vm2362, %v2333, %v2369
        %v2373 = vadd.f32 %v1996, %v2363
        %v2374 = vadd.f32 %v1997, %v2370
        %2375 = vst [vmem:[#allocation2] sm:$0xff] %v2373
        %2376 = vst [vmem:[#allocation2 + $0x8] sm:$0xff] %v2374
        %v2377 = vld [vmem:[#allocation3] sm:$0xff]
        %vm2378 = vcmask 7168
        %v2379 = vsel %vm2378, %v908, 0.0
        %v2380 = vsel %vm2378, %v909, 0.0
        %v2381 = vadd.f32 %v2379, %v2380
        %v2382 = vsel %vm2378, %v910, 0.0
        %v2383 = vadd.f32 %v2381, %v2382
        %v2384 = vsel %vm2378, %v911, 0.0
        %v2385 = vadd.f32 %v2383, %v2384
        %v2386 = vsel %vm2378, %v912, 0.0
        %v2387 = vadd.f32 %v2385, %v2386
        %v2388 = vsel %vm2378, %v913, 0.0
        %v2389 = vadd.f32 %v2387, %v2388
        %v2390 = vsel %vm2378, %v914, 0.0
        %v2391 = vadd.f32 %v2389, %v2390
        %v2392 = vsel %vm2378, %v915, 0.0
        %v2393 = vadd.f32 %v2391, %v2392
        %v2394 = vrot.slane %v2393, 4
        %v2395 = vadd.f32 %v2393, %v2394
        %v2396 = vrot.slane %v2395, 2
        %v2397 = vadd.f32 %v2395, %v2396
        %v2398 = vrot.slane %v2397, 1
        %v2399 = vadd.f32 %v2397, %v2398
        %v2400 = vsel %vm2378, %v916, 0.0
        %v2401 = vsel %vm2378, %v917, 0.0
        %v2402 = vadd.f32 %v2400, %v2401
        %v2403 = vsel %vm2378, %v918, 0.0
        %v2404 = vadd.f32 %v2402, %v2403
        %v2405 = vsel %vm2378, %v919, 0.0
        %v2406 = vadd.f32 %v2404, %v2405
        %v2407 = vsel %vm2378, %v920, 0.0
        %v2408 = vadd.f32 %v2406, %v2407
        %v2409 = vsel %vm2378, %v921, 0.0
        %v2410 = vadd.f32 %v2408, %v2409
        %v2411 = vsel %vm2378, %v922, 0.0
        %v2412 = vadd.f32 %v2410, %v2411
        %v2413 = vsel %vm2378, %v923, 0.0
        %v2414 = vadd.f32 %v2412, %v2413
        %v2415 = vrot.slane %v2414, 4
        %v2416 = vadd.f32 %v2414, %v2415
        %v2417 = vrot.slane %v2416, 2
        %v2418 = vadd.f32 %v2416, %v2417
        %v2419 = vrot.slane %v2418, 1
        %v2420 = vadd.f32 %v2418, %v2419
        %v2421 = vsel %vm2378, %v924, 0.0
        %v2422 = vsel %vm2378, %v925, 0.0
        %v2423 = vadd.f32 %v2421, %v2422
        %v2424 = vsel %vm2378, %v926, 0.0
        %v2425 = vadd.f32 %v2423, %v2424
        %v2426 = vsel %vm2378, %v927, 0.0
        %v2427 = vadd.f32 %v2425, %v2426
        %v2428 = vsel %vm2378, %v928, 0.0
        %v2429 = vadd.f32 %v2427, %v2428
        %v2430 = vsel %vm2378, %v929, 0.0
        %v2431 = vadd.f32 %v2429, %v2430
        %v2432 = vsel %vm2378, %v930, 0.0
        %v2433 = vadd.f32 %v2431, %v2432
        %v2434 = vsel %vm2378, %v931, 0.0
        %v2435 = vadd.f32 %v2433, %v2434
        %v2436 = vrot.slane %v2435, 4
        %v2437 = vadd.f32 %v2435, %v2436
        %v2438 = vrot.slane %v2437, 2
        %v2439 = vadd.f32 %v2437, %v2438
        %v2440 = vrot.slane %v2439, 1
        %v2441 = vadd.f32 %v2439, %v2440
        %v2442 = vsel %vm2378, %v932, 0.0
        %v2443 = vsel %vm2378, %v933, 0.0
        %v2444 = vadd.f32 %v2442, %v2443
        %v2445 = vsel %vm2378, %v934, 0.0
        %v2446 = vadd.f32 %v2444, %v2445
        %v2447 = vsel %vm2378, %v935, 0.0
        %v2448 = vadd.f32 %v2446, %v2447
        %v2449 = vsel %vm2378, %v936, 0.0
        %v2450 = vadd.f32 %v2448, %v2449
        %v2451 = vsel %vm2378, %v937, 0.0
        %v2452 = vadd.f32 %v2450, %v2451
        %v2453 = vsel %vm2378, %v938, 0.0
        %v2454 = vadd.f32 %v2452, %v2453
        %v2455 = vsel %vm2378, %v939, 0.0
        %v2456 = vadd.f32 %v2454, %v2455
        %v2457 = vrot.slane %v2456, 4
        %v2458 = vadd.f32 %v2456, %v2457
        %v2459 = vrot.slane %v2458, 2
        %v2460 = vadd.f32 %v2458, %v2459
        %v2461 = vrot.slane %v2460, 1
        %v2462 = vadd.f32 %v2460, %v2461
        %v2463 = vsel %vm2378, %v940, 0.0
        %v2464 = vsel %vm2378, %v941, 0.0
        %v2465 = vadd.f32 %v2463, %v2464
        %v2466 = vsel %vm2378, %v942, 0.0
        %v2467 = vadd.f32 %v2465, %v2466
        %v2468 = vsel %vm2378, %v943, 0.0
        %v2469 = vadd.f32 %v2467, %v2468
        %v2470 = vsel %vm2378, %v944, 0.0
        %v2471 = vadd.f32 %v2469, %v2470
        %v2472 = vsel %vm2378, %v945, 0.0
        %v2473 = vadd.f32 %v2471, %v2472
        %v2474 = vsel %vm2378, %v946, 0.0
        %v2475 = vadd.f32 %v2473, %v2474
        %v2476 = vsel %vm2378, %v947, 0.0
        %v2477 = vadd.f32 %v2475, %v2476
        %v2478 = vrot.slane %v2477, 4
        %v2479 = vadd.f32 %v2477, %v2478
        %v2480 = vrot.slane %v2479, 2
        %v2481 = vadd.f32 %v2479, %v2480
        %v2482 = vrot.slane %v2481, 1
        %v2483 = vadd.f32 %v2481, %v2482
        %v2484 = vsel %vm2378, %v948, 0.0
        %v2485 = vsel %vm2378, %v949, 0.0
        %v2486 = vadd.f32 %v2484, %v2485
        %v2487 = vsel %vm2378, %v950, 0.0
        %v2488 = vadd.f32 %v2486, %v2487
        %v2489 = vsel %vm2378, %v951, 0.0
        %v2490 = vadd.f32 %v2488, %v2489
        %v2491 = vsel %vm2378, %v952, 0.0
        %v2492 = vadd.f32 %v2490, %v2491
        %v2493 = vsel %vm2378, %v953, 0.0
        %v2494 = vadd.f32 %v2492, %v2493
        %v2495 = vsel %vm2378, %v954, 0.0
        %v2496 = vadd.f32 %v2494, %v2495
        %v2497 = vsel %vm2378, %v955, 0.0
        %v2498 = vadd.f32 %v2496, %v2497
        %v2499 = vrot.slane %v2498, 4
        %v2500 = vadd.f32 %v2498, %v2499
        %v2501 = vrot.slane %v2500, 2
        %v2502 = vadd.f32 %v2500, %v2501
        %v2503 = vrot.slane %v2502, 1
        %v2504 = vadd.f32 %v2502, %v2503
        %v2505 = vsel %vm2378, %v956, 0.0
        %v2506 = vsel %vm2378, %v957, 0.0
        %v2507 = vadd.f32 %v2505, %v2506
        %v2508 = vsel %vm2378, %v958, 0.0
        %v2509 = vadd.f32 %v2507, %v2508
        %v2510 = vsel %vm2378, %v959, 0.0
        %v2511 = vadd.f32 %v2509, %v2510
        %v2512 = vsel %vm2378, %v960, 0.0
        %v2513 = vadd.f32 %v2511, %v2512
        %v2514 = vsel %vm2378, %v961, 0.0
        %v2515 = vadd.f32 %v2513, %v2514
        %v2516 = vsel %vm2378, %v962, 0.0
        %v2517 = vadd.f32 %v2515, %v2516
        %v2518 = vsel %vm2378, %v963, 0.0
        %v2519 = vadd.f32 %v2517, %v2518
        %v2520 = vrot.slane %v2519, 4
        %v2521 = vadd.f32 %v2519, %v2520
        %v2522 = vrot.slane %v2521, 2
        %v2523 = vadd.f32 %v2521, %v2522
        %v2524 = vrot.slane %v2523, 1
        %v2525 = vadd.f32 %v2523, %v2524
        %v2526 = vsel %vm2378, %v964, 0.0
        %v2527 = vsel %vm2378, %v965, 0.0
        %v2528 = vadd.f32 %v2526, %v2527
        %v2529 = vsel %vm2378, %v966, 0.0
        %v2530 = vadd.f32 %v2528, %v2529
        %v2531 = vsel %vm2378, %v967, 0.0
        %v2532 = vadd.f32 %v2530, %v2531
        %v2533 = vsel %vm2378, %v968, 0.0
        %v2534 = vadd.f32 %v2532, %v2533
        %v2535 = vsel %vm2378, %v969, 0.0
        %v2536 = vadd.f32 %v2534, %v2535
        %v2537 = vsel %vm2378, %v970, 0.0
        %v2538 = vadd.f32 %v2536, %v2537
        %v2539 = vsel %vm2378, %v971, 0.0
        %v2540 = vadd.f32 %v2538, %v2539
        %v2541 = vrot.slane %v2540, 4
        %v2542 = vadd.f32 %v2540, %v2541
        %v2543 = vrot.slane %v2542, 2
        %v2544 = vadd.f32 %v2542, %v2543
        %v2545 = vrot.slane %v2544, 1
        %v2546 = vadd.f32 %v2544, %v2545
        %v2555 = vsel %vm2350, %v2420, %v2399
        %v2556 = vsel %vm2352, %v2441, %v2555
        %v2557 = vsel %vm2354, %v2462, %v2556
        %v2558 = vsel %vm2356, %v2483, %v2557
        %v2559 = vsel %vm2358, %v2504, %v2558
        %v2560 = vsel %vm2360, %v2525, %v2559
        %v2561 = vsel %vm2362, %v2546, %v2560
        %v2563 = vadd.f32 %v2377, %v2561
        %2564 = vst.msk [vmem:[#allocation3] sm:$0xff] %vm2378, %v2563
        %p2565 = scmp.eq.s32.totalorder %s24, 3
        // Predicated region
        $region121: #{tpu_custom_call.1} parent=103 // pred_check
          %p2566 = pneg %p2565
        $region122: #{tpu_custom_call.1} parent=103 // pred_check_branch
          %2568 = sbr.rel (%p2566) target = $region124
        $region123: #{tpu_custom_call.1} parent=103 // pred_region
          %v2569 = vld [vmem:[#allocation3] sm:$0xff]
          %v2570 = vmax.f32 %v2569, 1.0
          %v2571 = vld [vmem:[#allocation2] sm:$0xff]
          %v2572 = vld [vmem:[#allocation2 + $0x8] sm:$0xff]
          %v2573 = vrcp.pop %v2570
          %2575 = vset.pattern.permute.xlu0 0
          %2576 = vperm.xlu0 %2575, %v2573
          %v2577 = vpop.permute.xlu0 %2576
          %v2579 = vmul.f32 %v2571, %v2577
          %v2580 = vmul.f32 %v2572, %v2577
          %v2581 = vld [vmem:[#allocation6] sm:$0xff]
          %v2582 = vld [vmem:[#allocation6 + $0x8] sm:$0xff]
          %v2583 = vld [vmem:[#allocation6 + $0x10] sm:$0xff]
          %v2584 = vld [vmem:[#allocation6 + $0x18] sm:$0xff]
          %v2585 = vld [vmem:[#allocation6 + $0x20] sm:$0xff]
          %v2586 = vld [vmem:[#allocation6 + $0x28] sm:$0xff]
          %v2587 = vld [vmem:[#allocation6 + $0x30] sm:$0xff]
          %v2588 = vld [vmem:[#allocation6 + $0x38] sm:$0xff]
          %v2589 = vld [vmem:[#allocation6 + $0x40] sm:$0xff]
          %v2590 = vld [vmem:[#allocation6 + $0x48] sm:$0xff]
          %v2591 = vld [vmem:[#allocation6 + $0x50] sm:$0xff]
          %v2592 = vld [vmem:[#allocation6 + $0x58] sm:$0xff]
          %v2593 = vld [vmem:[#allocation6 + $0x60] sm:$0xff]
          %v2594 = vld [vmem:[#allocation6 + $0x68] sm:$0xff]
          %v2595 = vld [vmem:[#allocation6 + $0x70] sm:$0xff]
          %v2596 = vld [vmem:[#allocation6 + $0x78] sm:$0xff]
          %v2597 = vld [vmem:[#allocation6 + $0x80] sm:$0xff]
          %v2598 = vld [vmem:[#allocation6 + $0x88] sm:$0xff]
          %v2599 = vld [vmem:[#allocation6 + $0x90] sm:$0xff]
          %v2600 = vld [vmem:[#allocation6 + $0x98] sm:$0xff]
          %v2601 = vld [vmem:[#allocation6 + $0xa0] sm:$0xff]
          %v2602 = vld [vmem:[#allocation6 + $0xa8] sm:$0xff]
          %v2603 = vld [vmem:[#allocation6 + $0xb0] sm:$0xff]
          %v2604 = vld [vmem:[#allocation6 + $0xb8] sm:$0xff]
          %v2605 = vld [vmem:[#allocation6 + $0xc0] sm:$0xff]
          %v2606 = vld [vmem:[#allocation6 + $0xc8] sm:$0xff]
          %v2607 = vld [vmem:[#allocation6 + $0xd0] sm:$0xff]
          %v2608 = vld [vmem:[#allocation6 + $0xd8] sm:$0xff]
          %v2609 = vld [vmem:[#allocation6 + $0xe0] sm:$0xff]
          %v2610 = vld [vmem:[#allocation6 + $0xe8] sm:$0xff]
          %v2611 = vld [vmem:[#allocation6 + $0xf0] sm:$0xff]
          %v2612 = vld [vmem:[#allocation6 + $0xf8] sm:$0xff]
          %v2613 = vld [vmem:[%s3] sm:$0x1]
          %v2615 = vperm.slane %v2613, 0
          %2617 = vmatpush.msra.mxu0 %v2596
          %2618 = vmatpush.msra.mxu0 %v2595
          %2619 = vmatpush.msra.mxu0 %v2594
          %2620 = vmatpush.msra.mxu0 %v2593
          %2621 = vmatpush.msra.mxu0 %v2592
          %2622 = vmatpush.msra.mxu0 %v2591
          %2623 = vmatpush.msra.mxu0 %v2590
          %2624 = vmatpush.msra.mxu0 %v2589
          %2625 = vmatpush.msra.mxu0 %v2588
          %2626 = vmatpush.msra.mxu0 %v2587
          %2627 = vmatpush.msra.mxu0 %v2586
          %2628 = vmatpush.msra.mxu0 %v2585
          %2629 = vmatpush.msra.mxu0 %v2584
          %2630 = vmatpush.msra.mxu0 %v2583
          %2631 = vmatpush.msra.mxu0 %v2582
          %2632 = vmatpush.msra.mxu0 %v2581
          %2633 = vmatmul.f32.gmra.mxu0 %v2579
          %v2634 = vpop.f32.mrf.mxu0
          %v2635 = vadd.f32 %v2615, %v2634
          %2636 = vdwg.mxu0
          %2637 = vmatpush.msra.mxu0 %v2612
          %2638 = vmatpush.msra.mxu0 %v2611
          %2639 = vmatpush.msra.mxu0 %v2610
          %2640 = vmatpush.msra.mxu0 %v2609
          %2641 = vmatpush.msra.mxu0 %v2608
          %2642 = vmatpush.msra.mxu0 %v2607
          %2643 = vmatpush.msra.mxu0 %v2606
          %2644 = vmatpush.msra.mxu0 %v2605
          %2645 = vmatpush.msra.mxu0 %v2604
          %2646 = vmatpush.msra.mxu0 %v2603
          %2647 = vmatpush.msra.mxu0 %v2602
          %2648 = vmatpush.msra.mxu0 %v2601
          %2649 = vmatpush.msra.mxu0 %v2600
          %2650 = vmatpush.msra.mxu0 %v2599
          %2651 = vmatpush.msra.mxu0 %v2598
          %2652 = vmatpush.msra.mxu0 %v2597
          %2653 = vmatmul.f32.gmra.mxu0 %v2580
          %v2654 = vpop.f32.mrf.mxu0
          %v2655 = vadd.f32 %v2635, %v2654
          %2656 = vdwg.mxu0
          %2657 = vst [vmem:[%s831] sm:$0xff] %v2655
        $region124: #{tpu_custom_call.1} parent=103 // pred_fallthru
          _
        %s2658 = sand.u32 %s137, 1
        %s2659 = scalar_lea.sflag [#allocation8], %s2658
        %s2660 = sand.u32 %s137, 1
        %s2661 = smul.addr %s2660, 8
        %s2662 = scalar_lea.vmem [#allocation9], %s2661
        // Predicated region
        $region125: #{tpu_custom_call.1} parent=103 // pred_check
          %p2663 = pneg %p147
        $region126: #{tpu_custom_call.1} parent=103 // pred_check_branch
          %2665 = sbr.rel (%p2663) target = $region128
        $region127: #{tpu_custom_call.1} parent=103 // pred_region
          %2667 = vsyncadd %s2659, 0
          %s2668 = smul.addr %s23, 8
          %s2669 = scalar_lea.hbm %s4, %s2668
          %s2671 = sshll.u32 %s2662, 4
          %s2672 = int_to_ptr.vmem [resolvable:$true] %s2671
          %s2673 = sshll.u32 %s2669, 4
          %s2674 = int_to_ptr.hbm [resolvable:$true] %s2673
          %2676 = dma.vmem_to_hbm [thread:$0]  %s2672, 128, %s2674, %s2659
        $region128: #{tpu_custom_call.1} parent=103 // pred_fallthru
          _
      $region104: #{tpu_custom_call.1} parent=5 // pred_fallthru
        _
      %p2677 = scmp.le.s32.totalorder 2, %s14
      // Predicated region
      $region129: #{tpu_custom_call.1} parent=5 // pred_check
        %p2678 = pneg %p2677
      $region130: #{tpu_custom_call.1} parent=5 // pred_check_branch
        %2680 = sbr.rel (%p2678) target = $region132
      $region131: #{tpu_custom_call.1} parent=5 // pred_region
        %s2681 = ssub.s32 %s14, 2
        // Predicated region
        $region133: #{tpu_custom_call.1} parent=131 // pred_check
          %p2682 = pneg %p153
        $region134: #{tpu_custom_call.1} parent=131 // pred_check_branch
          %2684 = sbr.rel (%p2682) target = $region136
        $region135: #{tpu_custom_call.1} parent=131 // pred_region
          %s2685 = sand.u32 %s138, 1
          %s2686 = scalar_lea.sflag [#allocation8], %s2685
          %s2687 = sand.u32 %s138, 1
          %s2688 = smul.addr %s2687, 8
          %s2689 = scalar_lea.vmem [#allocation9], %s2688
          %2691 = dma.done %s2686, 128
        $region136: #{tpu_custom_call.1} parent=131 // pred_fallthru
          _
      $region132: #{tpu_custom_call.1} parent=5 // pred_fallthru
        _
    $region6: #{tpu_custom_call.1} parent=1 // loop_footer
      %s18 = sadd.s32 1, %s14
    $region7: #{tpu_custom_call.1} parent=1 // loop_footer_branch
      %13 = sbr.rel target = $region3
    $region8: #{tpu_custom_call.1} parent=1 // loop_exit
      _
    %2692 = vsyncpa [#allocation7], 1
    %s2693 = scalar_lea.sflag [#allocation7], 1
    %2694 = vsyncpa %s2693, 1
    %2695 = vsyncpa [#allocation8], 1
    %s2696 = scalar_lea.sflag [#allocation8], 1
    %2697 = vsyncpa %s2696, 1

</llo_original>
